<compile_context>
chip_gen: v5e
topology: v5e:2x2
jax: 0.10.0
libtpu: 0.0.40
codegen_flags: <defaults>
</compile_context>

<pallas_src>
import functools

import jax
import jax.numpy as jnp
from jax.experimental import pallas as pl
from jax.experimental.pallas import tpu as pltpu

LANE = 128


def _pad_axis(a, axis, multiple):
    pad = (-a.shape[axis]) % multiple
    if pad == 0:
        return a
    widths = [(0, 0)] * a.ndim
    widths[axis] = (0, pad)
    return jnp.pad(a, widths)


# ----------------------------------------------------------------------------
# Fused kernel: hooked layer + SAE encode/ablate/decode + rest of the A2C net.
#   h      = relu(x @ W1 + b1)               (hooked activation)
#   z      = relu(h @ W_enc + b_enc) * mask  (SAE features, ablated)
#   h_mod  = z @ W_dec + b_dec               (activation replacement)
#   h2     = relu(h_mod @ W2 + b2)
#   heads  = h2 @ [W_mu | W_v | 0-pad] + [b_mu | b_v | 0-pad]   (lane-dense)
# Matmul operands are bf16 (MXU), accumulation & elementwise in f32.
# ----------------------------------------------------------------------------
def fused_sae_a2c_kernel(x_ref, w1_ref, b1_ref,
                         we_ref, be_ref, wd_ref, bd_ref, mask_ref,
                         w2_ref, b2_ref, wh_ref, bh_ref,
                         heads_ref, z_ref):
    bf16 = jnp.bfloat16

    h = jnp.maximum(
        jnp.dot(x_ref[...], w1_ref[...], preferred_element_type=jnp.float32)
        + b1_ref[...], 0.0)

    z = jnp.maximum(
        jnp.dot(h.astype(bf16), we_ref[...], preferred_element_type=jnp.float32)
        + be_ref[...], 0.0)
    z = z * mask_ref[...]                       # ablate_feature / clear_ablation
    z_ref[...] = z                              # accumulated SAE features

    h_mod = (jnp.dot(z.astype(bf16), wd_ref[...],
                     preferred_element_type=jnp.float32) + bd_ref[...])

    h2 = jnp.maximum(
        jnp.dot(h_mod.astype(bf16), w2_ref[...],
                preferred_element_type=jnp.float32) + b2_ref[...], 0.0)

    heads_ref[...] = (
        jnp.dot(h2.astype(bf16), wh_ref[...],
                preferred_element_type=jnp.float32) + bh_ref[...])


# ----------------------------------------------------------------------------
# Parameter prep: pad to lane-dense layouts, merge mu/value heads, cast matmul
# weights to bf16 (biases / mask stay f32).
# ----------------------------------------------------------------------------
def prepare_kernel_params(params):
    bf16, f32 = jnp.bfloat16, jnp.float32
    w_heads = jnp.concatenate([params["w_mu"], params["w_v"]], axis=1)   # [H2, A+1]
    b_heads = jnp.concatenate([params["b_mu"], params["b_v"]], axis=1)   # [1, A+1]
    return {
        "w1": _pad_axis(params["w1"], 0, LANE).astype(bf16),             # [OBSp, H1]
        "b1": params["b1"].astype(f32),
        "w_enc": params["w_enc"].astype(bf16),                           # [H1, F]
        "b_enc": params["b_enc"].astype(f32),
        "w_dec": params["w_dec"].astype(bf16),                           # [F, H1]
        "b_dec": params["b_dec"].astype(f32),
        "w2": _pad_axis(params["w2"], 1, LANE).astype(bf16),             # [H1, H2p]
        "b2": _pad_axis(params["b2"], 1, LANE).astype(f32),
        "w_heads": _pad_axis(_pad_axis(w_heads, 0, LANE), 1, LANE).astype(bf16),
        "b_heads": _pad_axis(b_heads, 1, LANE).astype(f32),
    }


# ----------------------------------------------------------------------------
# Forward wrapper = SAENetworkWrapper.forward(input_dict) with an SAE hook.
# ----------------------------------------------------------------------------
@functools.partial(jax.jit, static_argnames=("num_actions", "b_tile"))
def sae_network_forward(kp, obs, ablate_mask, *, num_actions, b_tile=128):
    B = obs.shape[0]
    x = _pad_axis(obs, 1, LANE).astype(jnp.bfloat16)   # lane-dense obs
    x = _pad_axis(x, 0, b_tile)                        # batch -> multiple of tile
    Bp = x.shape[0]

    OBS_P, H1 = kp["w1"].shape
    F = kp["w_enc"].shape[1]
    H2P = kp["w2"].shape[1]
    HP = kp["w_heads"].shape[1]

    const = lambda i: (0, 0)                           # weights stay VMEM-resident
    batch = lambda i: (i, 0)

    heads, z = pl.pallas_call(
        fused_sae_a2c_kernel,
        out_shape=(jax.ShapeDtypeStruct((Bp, HP), jnp.float32),
                   jax.ShapeDtypeStruct((Bp, F), jnp.float32)),
        grid_spec=pltpu.PrefetchScalarGridSpec(
            num_scalar_prefetch=0,
            grid=(Bp // b_tile,),
            in_specs=[
                pl.BlockSpec((b_tile, OBS_P), batch),  # x (pipelined)
                pl.BlockSpec((OBS_P, H1), const),      # w1
                pl.BlockSpec((1, H1), const),          # b1
                pl.BlockSpec((H1, F), const),          # w_enc
                pl.BlockSpec((1, F), const),           # b_enc
                pl.BlockSpec((F, H1), const),          # w_dec
                pl.BlockSpec((1, H1), const),          # b_dec
                pl.BlockSpec((1, F), const),           # ablation mask
                pl.BlockSpec((H1, H2P), const),        # w2
                pl.BlockSpec((1, H2P), const),         # b2
                pl.BlockSpec((H2P, HP), const),        # merged heads W
                pl.BlockSpec((1, HP), const),          # merged heads b
            ],
            out_specs=(pl.BlockSpec((b_tile, HP), batch),
                       pl.BlockSpec((b_tile, F), batch)),
        ),
        compiler_params=pltpu.CompilerParams(
            dimension_semantics=("parallel",)),
    )(x, kp["w1"], kp["b1"],
      kp["w_enc"], kp["b_enc"], kp["w_dec"], kp["b_dec"], ablate_mask,
      kp["w2"], kp["b2"], kp["w_heads"], kp["b_heads"])

    return {
        "mu": heads[:B, :num_actions],
        "value": heads[:B, num_actions:num_actions + 1],
        "sae_features": z[:B],
    }


def init_params(key, obs_dim, hidden1, sae_feats, hidden2, actions):
    ks = jax.random.split(key, 6)
    s = lambda fan_in: 1.0 / jnp.sqrt(fan_in)
    return {
        "w1":    jax.random.normal(ks[0], (obs_dim, hidden1), jnp.float32) * s(obs_dim),
        "b1":    jnp.zeros((1, hidden1), jnp.float32),
        "w_enc": jax.random.normal(ks[1], (hidden1, sae_feats), jnp.float32) * s(hidden1),
        "b_enc": jnp.zeros((1, sae_feats), jnp.float32),
        "w_dec": jax.random.normal(ks[2], (sae_feats, hidden1), jnp.float32) * s(sae_feats),
        "b_dec": jnp.zeros((1, hidden1), jnp.float32),
        "w2":    jax.random.normal(ks[3], (hidden1, hidden2), jnp.float32) * s(hidden1),
        "b2":    jnp.zeros((1, hidden2), jnp.float32),
        "w_mu":  jax.random.normal(ks[4], (hidden2, actions), jnp.float32) * s(hidden2),
        "b_mu":  jnp.zeros((1, actions), jnp.float32),
        "w_v":   jax.random.normal(ks[5], (hidden2, 1), jnp.float32) * s(hidden2),
        "b_v":   jnp.zeros((1, 1), jnp.float32),
    }


def reference_forward(kp, obs, mask, num_actions):
    """Pure-JAX reference mirroring the kernel math (bf16 matmul, f32 accum)."""
    bf16 = jnp.bfloat16
    x = _pad_axis(obs, 1, LANE).astype(bf16)
    h = jnp.maximum(
        jnp.dot(x, kp["w1"], preferred_element_type=jnp.float32) + kp["b1"], 0.0)
    z = jnp.maximum(
        jnp.dot(h.astype(bf16), kp["w_enc"], preferred_element_type=jnp.float32)
        + kp["b_enc"], 0.0) * mask
    h_mod = (jnp.dot(z.astype(bf16), kp["w_dec"], preferred_element_type=jnp.float32)
             + kp["b_dec"])
    h2 = jnp.maximum(
        jnp.dot(h_mod.astype(bf16), kp["w2"], preferred_element_type=jnp.float32)
        + kp["b2"], 0.0)
    heads = (jnp.dot(h2.astype(bf16), kp["w_heads"], preferred_element_type=jnp.float32)
             + kp["b_heads"])
    return heads[:, :num_actions], heads[:, num_actions:num_actions + 1], z


if __name__ == "__main__":
    # Small but grid-exercising shapes: batch 200 (padded to 2x128 tiles).
    B, OBS, H1, F, H2, A = 200, 32, 128, 256, 64, 8
    B_TILE = 128

    key = jax.random.PRNGKey(0)
    k_params, k_obs = jax.random.split(key)
    params = init_params(k_params, OBS, H1, F, H2, A)
    obs = jax.random.normal(k_obs, (B, OBS), jnp.float32)

    # ablate_feature(layer_name, feature_idx=3): zero SAE latent 3.
    ablate_mask = jnp.ones((1, F), jnp.float32).at[0, 3].set(0.0)

    kp = prepare_kernel_params(params)
    out = sae_network_forward(kp, obs, ablate_mask, num_actions=A, b_tile=B_TILE)
    jax.block_until_ready(out)

    mu_ref, v_ref, z_ref = reference_forward(kp, obs, ablate_mask, A)

    assert out["mu"].shape == (B, A) and out["value"].shape == (B, 1)
    assert jnp.allclose(out["mu"], mu_ref, atol=1e-3, rtol=1e-3), "mu mismatch"
    assert jnp.allclose(out["value"], v_ref, atol=1e-3, rtol=1e-3), "value mismatch"
    assert jnp.allclose(out["sae_features"], z_ref, atol=1e-3, rtol=1e-3), \
        "sae feature mismatch"
    assert jnp.all(out["sae_features"][:, 3] == 0.0), "ablation not applied"

    print("KERNEL_OK")
</pallas_src>

<mosaic_0001>
module attributes {stable_mosaic.version = 11 : i64} {
  func.func @fused_sae_a2c_kernel(%arg0: i32, %arg1: memref<128x128xbf16, #tpu.memory_space<vmem>>, %arg2: memref<128x128xbf16, #tpu.memory_space<vmem>>, %arg3: memref<1x128xf32, #tpu.memory_space<vmem>>, %arg4: memref<128x256xbf16, #tpu.memory_space<vmem>>, %arg5: memref<1x256xf32, #tpu.memory_space<vmem>>, %arg6: memref<256x128xbf16, #tpu.memory_space<vmem>>, %arg7: memref<1x128xf32, #tpu.memory_space<vmem>>, %arg8: memref<1x256xf32, #tpu.memory_space<vmem>>, %arg9: memref<128x128xbf16, #tpu.memory_space<vmem>>, %arg10: memref<1x128xf32, #tpu.memory_space<vmem>>, %arg11: memref<128x128xbf16, #tpu.memory_space<vmem>>, %arg12: memref<1x128xf32, #tpu.memory_space<vmem>>, %arg13: memref<128x128xf32, #tpu.memory_space<vmem>>, %arg14: memref<128x256xf32, #tpu.memory_space<vmem>>) attributes {dimension_semantics = [#tpu.dimension_semantics<parallel>], iteration_bounds = array<i64: 2>, scalar_prefetch = 0 : i64, scratch_operands = 0 : i64, tpu.core_type = #tpu.core_type<tc>, window_params = [{transform_indices = @transform_0, window_bounds = array<i64: 128, 128>}, {pipeline_mode = #tpu.pipeline_mode<synchronous>, transform_indices = @transform_1, window_bounds = array<i64: 128, 128>}, {pipeline_mode = #tpu.pipeline_mode<synchronous>, transform_indices = @transform_2, window_bounds = array<i64: 1, 128>}, {pipeline_mode = #tpu.pipeline_mode<synchronous>, transform_indices = @transform_3, window_bounds = array<i64: 128, 256>}, {pipeline_mode = #tpu.pipeline_mode<synchronous>, transform_indices = @transform_4, window_bounds = array<i64: 1, 256>}, {pipeline_mode = #tpu.pipeline_mode<synchronous>, transform_indices = @transform_5, window_bounds = array<i64: 256, 128>}, {pipeline_mode = #tpu.pipeline_mode<synchronous>, transform_indices = @transform_6, window_bounds = array<i64: 1, 128>}, {pipeline_mode = #tpu.pipeline_mode<synchronous>, transform_indices = @transform_7, window_bounds = array<i64: 1, 256>}, {pipeline_mode = #tpu.pipeline_mode<synchronous>, transform_indices = @transform_8, window_bounds = array<i64: 128, 128>}, {pipeline_mode = #tpu.pipeline_mode<synchronous>, transform_indices = @transform_9, window_bounds = array<i64: 1, 128>}, {pipeline_mode = #tpu.pipeline_mode<synchronous>, transform_indices = @transform_10, window_bounds = array<i64: 128, 128>}, {pipeline_mode = #tpu.pipeline_mode<synchronous>, transform_indices = @transform_11, window_bounds = array<i64: 1, 128>}, {transform_indices = @transform_12, window_bounds = array<i64: 128, 128>}, {transform_indices = @transform_13, window_bounds = array<i64: 128, 256>}]} {
    %c0 = arith.constant 0 : index
    %c0_0 = arith.constant 0 : index
    %0 = vector.load %arg1[%c0, %c0_0] : memref<128x128xbf16, #tpu.memory_space<vmem>>, vector<128x128xbf16>
    %c0_1 = arith.constant 0 : index
    %c0_2 = arith.constant 0 : index
    %1 = vector.load %arg2[%c0_1, %c0_2] : memref<128x128xbf16, #tpu.memory_space<vmem>>, vector<128x128xbf16>
    %cst = arith.constant dense<0.000000e+00> : vector<128x128xf32>
    %2 = tpu.matmul %0, %1, %cst {dimension_numbers = #tpu.dot_dimension_numbers<[1], [0], [0], [1], [0, 0, 1, 1], [], []>} : vector<128x128xbf16>, vector<128x128xbf16>, vector<128x128xf32> -> vector<128x128xf32>
    %c0_3 = arith.constant 0 : index
    %c0_4 = arith.constant 0 : index
    %3 = vector.load %arg3[%c0_3, %c0_4] : memref<1x128xf32, #tpu.memory_space<vmem>>, vector<1x128xf32>
    %4 = vector.broadcast %3 : vector<1x128xf32> to vector<128x128xf32>
    %5 = arith.addf %2, %4 : vector<128x128xf32>
    %cst_5 = arith.constant 0.000000e+00 : f32
    %6 = vector.broadcast %cst_5 : f32 to vector<128x128xf32>
    %7 = arith.maximumf %5, %6 : vector<128x128xf32>
    %8 = arith.truncf %7 : vector<128x128xf32> to vector<128x128xbf16>
    %c0_6 = arith.constant 0 : index
    %c0_7 = arith.constant 0 : index
    %9 = vector.load %arg4[%c0_6, %c0_7] : memref<128x256xbf16, #tpu.memory_space<vmem>>, vector<128x256xbf16>
    %cst_8 = arith.constant dense<0.000000e+00> : vector<128x256xf32>
    %10 = tpu.matmul %8, %9, %cst_8 {dimension_numbers = #tpu.dot_dimension_numbers<[1], [0], [0], [1], [0, 0, 1, 1], [], []>} : vector<128x128xbf16>, vector<128x256xbf16>, vector<128x256xf32> -> vector<128x256xf32>
    %c0_9 = arith.constant 0 : index
    %c0_10 = arith.constant 0 : index
    %11 = vector.load %arg5[%c0_9, %c0_10] : memref<1x256xf32, #tpu.memory_space<vmem>>, vector<1x256xf32>
    %12 = vector.broadcast %11 : vector<1x256xf32> to vector<128x256xf32>
    %13 = arith.addf %10, %12 : vector<128x256xf32>
    %cst_11 = arith.constant 0.000000e+00 : f32
    %14 = vector.broadcast %cst_11 : f32 to vector<128x256xf32>
    %15 = arith.maximumf %13, %14 : vector<128x256xf32>
    %c0_12 = arith.constant 0 : index
    %c0_13 = arith.constant 0 : index
    %16 = vector.load %arg8[%c0_12, %c0_13] : memref<1x256xf32, #tpu.memory_space<vmem>>, vector<1x256xf32>
    %17 = vector.broadcast %16 : vector<1x256xf32> to vector<128x256xf32>
    %18 = arith.mulf %15, %17 : vector<128x256xf32>
    %c0_14 = arith.constant 0 : index
    %c0_15 = arith.constant 0 : index
    %19 = vector.load %arg14[%c0_14, %c0_15] : memref<128x256xf32, #tpu.memory_space<vmem>>, vector<128x256xf32>
    tpu.vector_store %arg14[%c0_14, %c0_15], %18 {strides = array<i32>} : memref<128x256xf32, #tpu.memory_space<vmem>>, vector<128x256xf32>,
    %20 = arith.truncf %18 : vector<128x256xf32> to vector<128x256xbf16>
    %c0_16 = arith.constant 0 : index
    %c0_17 = arith.constant 0 : index
    %21 = vector.load %arg6[%c0_16, %c0_17] : memref<256x128xbf16, #tpu.memory_space<vmem>>, vector<256x128xbf16>
    %cst_18 = arith.constant dense<0.000000e+00> : vector<128x128xf32>
    %22 = tpu.matmul %20, %21, %cst_18 {dimension_numbers = #tpu.dot_dimension_numbers<[1], [0], [0], [1], [0, 0, 1, 1], [], []>} : vector<128x256xbf16>, vector<256x128xbf16>, vector<128x128xf32> -> vector<128x128xf32>
    %c0_19 = arith.constant 0 : index
    %c0_20 = arith.constant 0 : index
    %23 = vector.load %arg7[%c0_19, %c0_20] : memref<1x128xf32, #tpu.memory_space<vmem>>, vector<1x128xf32>
    %24 = vector.broadcast %23 : vector<1x128xf32> to vector<128x128xf32>
    %25 = arith.addf %22, %24 : vector<128x128xf32>
    %26 = arith.truncf %25 : vector<128x128xf32> to vector<128x128xbf16>
    %c0_21 = arith.constant 0 : index
    %c0_22 = arith.constant 0 : index
    %27 = vector.load %arg9[%c0_21, %c0_22] : memref<128x128xbf16, #tpu.memory_space<vmem>>, vector<128x128xbf16>
    %cst_23 = arith.constant dense<0.000000e+00> : vector<128x128xf32>
    %28 = tpu.matmul %26, %27, %cst_23 {dimension_numbers = #tpu.dot_dimension_numbers<[1], [0], [0], [1], [0, 0, 1, 1], [], []>} : vector<128x128xbf16>, vector<128x128xbf16>, vector<128x128xf32> -> vector<128x128xf32>
    %c0_24 = arith.constant 0 : index
    %c0_25 = arith.constant 0 : index
    %29 = vector.load %arg10[%c0_24, %c0_25] : memref<1x128xf32, #tpu.memory_space<vmem>>, vector<1x128xf32>
    %30 = vector.broadcast %29 : vector<1x128xf32> to vector<128x128xf32>
    %31 = arith.addf %28, %30 : vector<128x128xf32>
    %cst_26 = arith.constant 0.000000e+00 : f32
    %32 = vector.broadcast %cst_26 : f32 to vector<128x128xf32>
    %33 = arith.maximumf %31, %32 : vector<128x128xf32>
    %34 = arith.truncf %33 : vector<128x128xf32> to vector<128x128xbf16>
    %c0_27 = arith.constant 0 : index
    %c0_28 = arith.constant 0 : index
    %35 = vector.load %arg11[%c0_27, %c0_28] : memref<128x128xbf16, #tpu.memory_space<vmem>>, vector<128x128xbf16>
    %cst_29 = arith.constant dense<0.000000e+00> : vector<128x128xf32>
    %36 = tpu.matmul %34, %35, %cst_29 {dimension_numbers = #tpu.dot_dimension_numbers<[1], [0], [0], [1], [0, 0, 1, 1], [], []>} : vector<128x128xbf16>, vector<128x128xbf16>, vector<128x128xf32> -> vector<128x128xf32>
    %c0_30 = arith.constant 0 : index
    %c0_31 = arith.constant 0 : index
    %37 = vector.load %arg12[%c0_30, %c0_31] : memref<1x128xf32, #tpu.memory_space<vmem>>, vector<1x128xf32>
    %38 = vector.broadcast %37 : vector<1x128xf32> to vector<128x128xf32>
    %39 = arith.addf %36, %38 : vector<128x128xf32>
    %c0_32 = arith.constant 0 : index
    %c0_33 = arith.constant 0 : index
    %40 = vector.load %arg13[%c0_32, %c0_33] : memref<128x128xf32, #tpu.memory_space<vmem>>, vector<128x128xf32>
    tpu.vector_store %arg13[%c0_32, %c0_33], %39 {strides = array<i32>} : memref<128x128xf32, #tpu.memory_space<vmem>>, vector<128x128xf32>,
    return
  }
  func.func @transform_0(%arg0: i32) -> (i32, i32) {
    %c0_i32 = arith.constant 0 : i32
    %c0_i32_0 = arith.constant 0 : i32
    return %arg0, %c0_i32 : i32, i32
  }
  func.func @transform_1(%arg0: i32) -> (i32, i32) {
    %c0_i32 = arith.constant 0 : i32
    %c0_i32_0 = arith.constant 0 : i32
    %c0_i32_1 = arith.constant 0 : i32
    return %c0_i32, %c0_i32_0 : i32, i32
  }
  func.func @transform_2(%arg0: i32) -> (i32, i32) {
    %c0_i32 = arith.constant 0 : i32
    %c0_i32_0 = arith.constant 0 : i32
    %c0_i32_1 = arith.constant 0 : i32
    return %c0_i32, %c0_i32_0 : i32, i32
  }
  func.func @transform_3(%arg0: i32) -> (i32, i32) {
    %c0_i32 = arith.constant 0 : i32
    %c0_i32_0 = arith.constant 0 : i32
    %c0_i32_1 = arith.constant 0 : i32
    return %c0_i32, %c0_i32_0 : i32, i32
  }
  func.func @transform_4(%arg0: i32) -> (i32, i32) {
    %c0_i32 = arith.constant 0 : i32
    %c0_i32_0 = arith.constant 0 : i32
    %c0_i32_1 = arith.constant 0 : i32
    return %c0_i32, %c0_i32_0 : i32, i32
  }
  func.func @transform_5(%arg0: i32) -> (i32, i32) {
    %c0_i32 = arith.constant 0 : i32
    %c0_i32_0 = arith.constant 0 : i32
    %c0_i32_1 = arith.constant 0 : i32
    return %c0_i32, %c0_i32_0 : i32, i32
  }
  func.func @transform_6(%arg0: i32) -> (i32, i32) {
    %c0_i32 = arith.constant 0 : i32
    %c0_i32_0 = arith.constant 0 : i32
    %c0_i32_1 = arith.constant 0 : i32
    return %c0_i32, %c0_i32_0 : i32, i32
  }
  func.func @transform_7(%arg0: i32) -> (i32, i32) {
    %c0_i32 = arith.constant 0 : i32
    %c0_i32_0 = arith.constant 0 : i32
    %c0_i32_1 = arith.constant 0 : i32
    return %c0_i32, %c0_i32_0 : i32, i32
  }
  func.func @transform_8(%arg0: i32) -> (i32, i32) {
    %c0_i32 = arith.constant 0 : i32
    %c0_i32_0 = arith.constant 0 : i32
    %c0_i32_1 = arith.constant 0 : i32
    return %c0_i32, %c0_i32_0 : i32, i32
  }
  func.func @transform_9(%arg0: i32) -> (i32, i32) {
    %c0_i32 = arith.constant 0 : i32
    %c0_i32_0 = arith.constant 0 : i32
    %c0_i32_1 = arith.constant 0 : i32
    return %c0_i32, %c0_i32_0 : i32, i32
  }
  func.func @transform_10(%arg0: i32) -> (i32, i32) {
    %c0_i32 = arith.constant 0 : i32
    %c0_i32_0 = arith.constant 0 : i32
    %c0_i32_1 = arith.constant 0 : i32
    return %c0_i32, %c0_i32_0 : i32, i32
  }
  func.func @transform_11(%arg0: i32) -> (i32, i32) {
    %c0_i32 = arith.constant 0 : i32
    %c0_i32_0 = arith.constant 0 : i32
    %c0_i32_1 = arith.constant 0 : i32
    return %c0_i32, %c0_i32_0 : i32, i32
  }
  func.func @transform_12(%arg0: i32) -> (i32, i32) {
    %c0_i32 = arith.constant 0 : i32
    %c0_i32_0 = arith.constant 0 : i32
    return %arg0, %c0_i32 : i32, i32
  }
  func.func @transform_13(%arg0: i32) -> (i32, i32) {
    %c0_i32 = arith.constant 0 : i32
    %c0_i32_0 = arith.constant 0 : i32
    return %arg0, %c0_i32 : i32, i32
  }
}

</mosaic_0001>

<llo_original>
// kernel: sae_network_forward.1
$region0: #{sae_network_forward.1}
  #allocation0 [shape = 'u32[]', space=smem, size = 0x4, offset = 0x4, fixed_abs, tag = 'smem constant byte address 0x4 - core index']
  #allocation1 [shape = 'u32[72,128]{1,0:T(1,128)}', space=vmem, size = 0x9000, scoped, tag = 'internal scratch']
  %s0 = inlined_call_operand.vmem [shape: bf16[256,128], index: 0, kind: input, shape index: {}]
  %s1 = inlined_call_operand.vmem [shape: bf16[128,128], index: 1, kind: input, shape index: {}]
  %s2 = inlined_call_operand.vmem [shape: f32[1,128], index: 2, kind: input, shape index: {}]
  %s3 = inlined_call_operand.vmem [shape: bf16[128,256], index: 3, kind: input, shape index: {}]
  %s4 = inlined_call_operand.vmem [shape: f32[1,256], index: 4, kind: input, shape index: {}]
  %s5 = inlined_call_operand.vmem [shape: bf16[256,128], index: 5, kind: input, shape index: {}]
  %s6 = inlined_call_operand.vmem [shape: f32[1,128], index: 6, kind: input, shape index: {}]
  %s7 = inlined_call_operand.vmem [shape: f32[1,256], index: 7, kind: input, shape index: {}]
  %s8 = inlined_call_operand.vmem [shape: bf16[128,128], index: 8, kind: input, shape index: {}]
  %s9 = inlined_call_operand.vmem [shape: f32[1,128], index: 9, kind: input, shape index: {}]
  %s10 = inlined_call_operand.vmem [shape: bf16[128,128], index: 10, kind: input, shape index: {}]
  %s11 = inlined_call_operand.vmem [shape: f32[1,128], index: 11, kind: input, shape index: {}]
  %s12 = inlined_call_operand.vmem [shape: f32[256,128], index: 12, kind: output, shape index: {0}]
  %s13 = inlined_call_operand.vmem [shape: f32[256,256], index: 13, kind: output, shape index: {1}]
  %14 = xla_tuple %s12, %s13
  %s15 = sld [smem:[#allocation0]]
  $region89: #{sae_network_forward.1} parent=0
    _
  %s17 = ssub.s32 1, %s15
  %s18 = scalar_select 0, %s17, %s15
  loop: start=0, step=1, limit=4
  $region2: #{sae_network_forward.1} parent=0 // loop_pre_header
    _
  $region3: #{sae_network_forward.1} parent=0 // loop_header
    %s20 = sphi 0, %s24
    %p21 = scmp.ge.s32.totalorder %s20, 4
    %s30 = sphi 0, %s32
    %s33 = sphi 0, %s30
    %s34 = sphi 0, %s33
    %s50 = sphi 0, %s34
    %s54 = sphi 0, %s54
    %s56 = sphi 0, %s54
    %s57 = sphi 0, %s56
    %s71 = sphi 0, %s57
    %s75 = sphi 0, %s75
    %s77 = sphi 0, %s75
    %s78 = sphi 0, %s77
    %s92 = sphi 0, %s78
    %s96 = sphi 0, %s96
    %s98 = sphi 0, %s96
    %s99 = sphi 0, %s98
    %s113 = sphi 0, %s99
    %s117 = sphi 0, %s117
    %s119 = sphi 0, %s117
    %s120 = sphi 0, %s119
    %s134 = sphi 0, %s120
    %s138 = sphi 0, %s138
    %s140 = sphi 0, %s138
    %s141 = sphi 0, %s140
    %s155 = sphi 0, %s141
    %s159 = sphi 0, %s159
    %s161 = sphi 0, %s159
    %s162 = sphi 0, %s161
    %s176 = sphi 0, %s162
    %s180 = sphi 0, %s180
    %s182 = sphi 0, %s180
    %s183 = sphi 0, %s182
    %s197 = sphi 0, %s183
    %s201 = sphi 0, %s201
    %s203 = sphi 0, %s201
    %s204 = sphi 0, %s203
    %s218 = sphi 0, %s204
    %s222 = sphi 0, %s222
    %s224 = sphi 0, %s222
    %s225 = sphi 0, %s224
    %s239 = sphi 0, %s225
    %s243 = sphi 0, %s243
    %s245 = sphi 0, %s243
    %s246 = sphi 0, %s245
    %s260 = sphi 0, %s246
    %s264 = sphi 0, %s264
    %s266 = sphi 0, %s264
    %s267 = sphi 0, %s266
    %s281 = sphi 0, %s267
    %s287 = sphi 0, %s289
    %s290 = sphi 0, %s287
    %s291 = sphi 0, %s290
    %s307 = sphi 0, %s291
    %s313 = sphi 0, %s315
    %s316 = sphi 0, %s313
    %s317 = sphi 0, %s316
    %s333 = sphi 0, %s317
  $region4: #{sae_network_forward.1} parent=0 // loop_header_branch
    %23 = sbr.rel (%p21) target = $region8
  $region5: #{sae_network_forward.1} parent=0 // loop_body
    %s25 = ssub.s32 %s20, 1
    %s26 = ssub.s32 %s20, 2
    %s27 = sadd.s32 %s20, 1
    %s28 = ssub.s32 %s20, %s27
    %p29 = scmp.eq.s32.totalorder %s28, 0
    %s31 = sadd.s32 %s30, 1
    %s32 = scalar_select %p29, %s30, %s31
    %p35 = pneg %p29
    %p36 = scmp.eq.s32.totalorder %s20, 1
    %p37 = por %p35, %p36
    %p38 = scmp.ne.s32.totalorder %s30, %s33
    %p39 = scmp.eq.s32.totalorder %s20, 0
    %p40 = por %p38, %p39
    %p41 = scmp.ne.s32.totalorder %s30, %s33
    %p42 = scmp.eq.s32.totalorder %s25, 1
    %p43 = por %p41, %p42
    %p44 = scmp.ne.s32.totalorder %s33, %s34
    %p45 = scmp.eq.s32.totalorder %s25, 0
    %p46 = por %p44, %p45
    %p47 = scmp.ne.s32.totalorder %s33, %s34
    %p48 = scmp.eq.s32.totalorder %s26, 1
    %p49 = por %p47, %p48
    %p51 = scmp.ne.s32.totalorder %s34, %s50
    %p52 = scmp.eq.s32.totalorder %s26, 0
    %p53 = por %p51, %p52
    %s55 = sadd.s32 %s54, 1
    %p58 = scmp.eq.s32.totalorder %s20, 1
    %p59 = scmp.ne.s32.totalorder %s54, %s56
    %p60 = scmp.eq.s32.totalorder %s20, 0
    %p61 = por %p59, %p60
    %p62 = scmp.ne.s32.totalorder %s54, %s56
    %p63 = scmp.eq.s32.totalorder %s25, 1
    %p64 = por %p62, %p63
    %p65 = scmp.ne.s32.totalorder %s56, %s57
    %p66 = scmp.eq.s32.totalorder %s25, 0
    %p67 = por %p65, %p66
    %p68 = scmp.ne.s32.totalorder %s56, %s57
    %p69 = scmp.eq.s32.totalorder %s26, 1
    %p70 = por %p68, %p69
    %p72 = scmp.ne.s32.totalorder %s57, %s71
    %p73 = scmp.eq.s32.totalorder %s26, 0
    %p74 = por %p72, %p73
    %s76 = sadd.s32 %s75, 1
    %p79 = scmp.eq.s32.totalorder %s20, 1
    %p80 = scmp.ne.s32.totalorder %s75, %s77
    %p81 = scmp.eq.s32.totalorder %s20, 0
    %p82 = por %p80, %p81
    %p83 = scmp.ne.s32.totalorder %s75, %s77
    %p84 = scmp.eq.s32.totalorder %s25, 1
    %p85 = por %p83, %p84
    %p86 = scmp.ne.s32.totalorder %s77, %s78
    %p87 = scmp.eq.s32.totalorder %s25, 0
    %p88 = por %p86, %p87
    %p89 = scmp.ne.s32.totalorder %s77, %s78
    %p90 = scmp.eq.s32.totalorder %s26, 1
    %p91 = por %p89, %p90
    %p93 = scmp.ne.s32.totalorder %s78, %s92
    %p94 = scmp.eq.s32.totalorder %s26, 0
    %p95 = por %p93, %p94
    %s97 = sadd.s32 %s96, 1
    %p100 = scmp.eq.s32.totalorder %s20, 1
    %p101 = scmp.ne.s32.totalorder %s96, %s98
    %p102 = scmp.eq.s32.totalorder %s20, 0
    %p103 = por %p101, %p102
    %p104 = scmp.ne.s32.totalorder %s96, %s98
    %p105 = scmp.eq.s32.totalorder %s25, 1
    %p106 = por %p104, %p105
    %p107 = scmp.ne.s32.totalorder %s98, %s99
    %p108 = scmp.eq.s32.totalorder %s25, 0
    %p109 = por %p107, %p108
    %p110 = scmp.ne.s32.totalorder %s98, %s99
    %p111 = scmp.eq.s32.totalorder %s26, 1
    %p112 = por %p110, %p111
    %p114 = scmp.ne.s32.totalorder %s99, %s113
    %p115 = scmp.eq.s32.totalorder %s26, 0
    %p116 = por %p114, %p115
    %s118 = sadd.s32 %s117, 1
    %p121 = scmp.eq.s32.totalorder %s20, 1
    %p122 = scmp.ne.s32.totalorder %s117, %s119
    %p123 = scmp.eq.s32.totalorder %s20, 0
    %p124 = por %p122, %p123
    %p125 = scmp.ne.s32.totalorder %s117, %s119
    %p126 = scmp.eq.s32.totalorder %s25, 1
    %p127 = por %p125, %p126
    %p128 = scmp.ne.s32.totalorder %s119, %s120
    %p129 = scmp.eq.s32.totalorder %s25, 0
    %p130 = por %p128, %p129
    %p131 = scmp.ne.s32.totalorder %s119, %s120
    %p132 = scmp.eq.s32.totalorder %s26, 1
    %p133 = por %p131, %p132
    %p135 = scmp.ne.s32.totalorder %s120, %s134
    %p136 = scmp.eq.s32.totalorder %s26, 0
    %p137 = por %p135, %p136
    %s139 = sadd.s32 %s138, 1
    %p142 = scmp.eq.s32.totalorder %s20, 1
    %p143 = scmp.ne.s32.totalorder %s138, %s140
    %p144 = scmp.eq.s32.totalorder %s20, 0
    %p145 = por %p143, %p144
    %p146 = scmp.ne.s32.totalorder %s138, %s140
    %p147 = scmp.eq.s32.totalorder %s25, 1
    %p148 = por %p146, %p147
    %p149 = scmp.ne.s32.totalorder %s140, %s141
    %p150 = scmp.eq.s32.totalorder %s25, 0
    %p151 = por %p149, %p150
    %p152 = scmp.ne.s32.totalorder %s140, %s141
    %p153 = scmp.eq.s32.totalorder %s26, 1
    %p154 = por %p152, %p153
    %p156 = scmp.ne.s32.totalorder %s141, %s155
    %p157 = scmp.eq.s32.totalorder %s26, 0
    %p158 = por %p156, %p157
    %s160 = sadd.s32 %s159, 1
    %p163 = scmp.eq.s32.totalorder %s20, 1
    %p164 = scmp.ne.s32.totalorder %s159, %s161
    %p165 = scmp.eq.s32.totalorder %s20, 0
    %p166 = por %p164, %p165
    %p167 = scmp.ne.s32.totalorder %s159, %s161
    %p168 = scmp.eq.s32.totalorder %s25, 1
    %p169 = por %p167, %p168
    %p170 = scmp.ne.s32.totalorder %s161, %s162
    %p171 = scmp.eq.s32.totalorder %s25, 0
    %p172 = por %p170, %p171
    %p173 = scmp.ne.s32.totalorder %s161, %s162
    %p174 = scmp.eq.s32.totalorder %s26, 1
    %p175 = por %p173, %p174
    %p177 = scmp.ne.s32.totalorder %s162, %s176
    %p178 = scmp.eq.s32.totalorder %s26, 0
    %p179 = por %p177, %p178
    %s181 = sadd.s32 %s180, 1
    %p184 = scmp.eq.s32.totalorder %s20, 1
    %p185 = scmp.ne.s32.totalorder %s180, %s182
    %p186 = scmp.eq.s32.totalorder %s20, 0
    %p187 = por %p185, %p186
    %p188 = scmp.ne.s32.totalorder %s180, %s182
    %p189 = scmp.eq.s32.totalorder %s25, 1
    %p190 = por %p188, %p189
    %p191 = scmp.ne.s32.totalorder %s182, %s183
    %p192 = scmp.eq.s32.totalorder %s25, 0
    %p193 = por %p191, %p192
    %p194 = scmp.ne.s32.totalorder %s182, %s183
    %p195 = scmp.eq.s32.totalorder %s26, 1
    %p196 = por %p194, %p195
    %p198 = scmp.ne.s32.totalorder %s183, %s197
    %p199 = scmp.eq.s32.totalorder %s26, 0
    %p200 = por %p198, %p199
    %s202 = sadd.s32 %s201, 1
    %p205 = scmp.eq.s32.totalorder %s20, 1
    %p206 = scmp.ne.s32.totalorder %s201, %s203
    %p207 = scmp.eq.s32.totalorder %s20, 0
    %p208 = por %p206, %p207
    %p209 = scmp.ne.s32.totalorder %s201, %s203
    %p210 = scmp.eq.s32.totalorder %s25, 1
    %p211 = por %p209, %p210
    %p212 = scmp.ne.s32.totalorder %s203, %s204
    %p213 = scmp.eq.s32.totalorder %s25, 0
    %p214 = por %p212, %p213
    %p215 = scmp.ne.s32.totalorder %s203, %s204
    %p216 = scmp.eq.s32.totalorder %s26, 1
    %p217 = por %p215, %p216
    %p219 = scmp.ne.s32.totalorder %s204, %s218
    %p220 = scmp.eq.s32.totalorder %s26, 0
    %p221 = por %p219, %p220
    %s223 = sadd.s32 %s222, 1
    %p226 = scmp.eq.s32.totalorder %s20, 1
    %p227 = scmp.ne.s32.totalorder %s222, %s224
    %p228 = scmp.eq.s32.totalorder %s20, 0
    %p229 = por %p227, %p228
    %p230 = scmp.ne.s32.totalorder %s222, %s224
    %p231 = scmp.eq.s32.totalorder %s25, 1
    %p232 = por %p230, %p231
    %p233 = scmp.ne.s32.totalorder %s224, %s225
    %p234 = scmp.eq.s32.totalorder %s25, 0
    %p235 = por %p233, %p234
    %p236 = scmp.ne.s32.totalorder %s224, %s225
    %p237 = scmp.eq.s32.totalorder %s26, 1
    %p238 = por %p236, %p237
    %p240 = scmp.ne.s32.totalorder %s225, %s239
    %p241 = scmp.eq.s32.totalorder %s26, 0
    %p242 = por %p240, %p241
    %s244 = sadd.s32 %s243, 1
    %p247 = scmp.eq.s32.totalorder %s20, 1
    %p248 = scmp.ne.s32.totalorder %s243, %s245
    %p249 = scmp.eq.s32.totalorder %s20, 0
    %p250 = por %p248, %p249
    %p251 = scmp.ne.s32.totalorder %s243, %s245
    %p252 = scmp.eq.s32.totalorder %s25, 1
    %p253 = por %p251, %p252
    %p254 = scmp.ne.s32.totalorder %s245, %s246
    %p255 = scmp.eq.s32.totalorder %s25, 0
    %p256 = por %p254, %p255
    %p257 = scmp.ne.s32.totalorder %s245, %s246
    %p258 = scmp.eq.s32.totalorder %s26, 1
    %p259 = por %p257, %p258
    %p261 = scmp.ne.s32.totalorder %s246, %s260
    %p262 = scmp.eq.s32.totalorder %s26, 0
    %p263 = por %p261, %p262
    %s265 = sadd.s32 %s264, 1
    %p268 = scmp.eq.s32.totalorder %s20, 1
    %p269 = scmp.ne.s32.totalorder %s264, %s266
    %p270 = scmp.eq.s32.totalorder %s20, 0
    %p271 = por %p269, %p270
    %p272 = scmp.ne.s32.totalorder %s264, %s266
    %p273 = scmp.eq.s32.totalorder %s25, 1
    %p274 = por %p272, %p273
    %p275 = scmp.ne.s32.totalorder %s266, %s267
    %p276 = scmp.eq.s32.totalorder %s25, 0
    %p277 = por %p275, %p276
    %p278 = scmp.ne.s32.totalorder %s266, %s267
    %p279 = scmp.eq.s32.totalorder %s26, 1
    %p280 = por %p278, %p279
    %p282 = scmp.ne.s32.totalorder %s267, %s281
    %p283 = scmp.eq.s32.totalorder %s26, 0
    %p284 = por %p282, %p283
    %s285 = ssub.s32 %s20, %s27
    %p286 = scmp.eq.s32.totalorder %s285, 0
    %s288 = sadd.s32 %s287, 1
    %s289 = scalar_select %p286, %s287, %s288
    %p292 = pneg %p286
    %p293 = scmp.eq.s32.totalorder %s20, 1
    %p294 = por %p292, %p293
    %p295 = scmp.ne.s32.totalorder %s287, %s290
    %p296 = scmp.eq.s32.totalorder %s20, 0
    %p297 = por %p295, %p296
    %p298 = scmp.ne.s32.totalorder %s287, %s290
    %p299 = scmp.eq.s32.totalorder %s25, 1
    %p300 = por %p298, %p299
    %p301 = scmp.ne.s32.totalorder %s290, %s291
    %p302 = scmp.eq.s32.totalorder %s25, 0
    %p303 = por %p301, %p302
    %p304 = scmp.ne.s32.totalorder %s290, %s291
    %p305 = scmp.eq.s32.totalorder %s26, 1
    %p306 = por %p304, %p305
    %p308 = scmp.ne.s32.totalorder %s291, %s307
    %p309 = scmp.eq.s32.totalorder %s26, 0
    %p310 = por %p308, %p309
    %s311 = ssub.s32 %s20, %s27
    %p312 = scmp.eq.s32.totalorder %s311, 0
    %s314 = sadd.s32 %s313, 1
    %s315 = scalar_select %p312, %s313, %s314
    %p318 = pneg %p312
    %p319 = scmp.eq.s32.totalorder %s20, 1
    %p320 = por %p318, %p319
    %p321 = scmp.ne.s32.totalorder %s313, %s316
    %p322 = scmp.eq.s32.totalorder %s20, 0
    %p323 = por %p321, %p322
    %p324 = scmp.ne.s32.totalorder %s313, %s316
    %p325 = scmp.eq.s32.totalorder %s25, 1
    %p326 = por %p324, %p325
    %p327 = scmp.ne.s32.totalorder %s316, %s317
    %p328 = scmp.eq.s32.totalorder %s25, 0
    %p329 = por %p327, %p328
    %p330 = scmp.ne.s32.totalorder %s316, %s317
    %p331 = scmp.eq.s32.totalorder %s26, 1
    %p332 = por %p330, %p331
    %p334 = scmp.ne.s32.totalorder %s317, %s333
    %p335 = scmp.eq.s32.totalorder %s26, 0
    %p336 = por %p334, %p335
    %p337 = scmp.le.s32.totalorder 1, %s20
    %p338 = scmp.lt.s32.totalorder %s20, 3
    %p339 = pnand %p337, %p338
    %p340 = pneg %p339
    // Predicated region
    $region9: #{sae_network_forward.1} parent=5 // pred_check
      _
    $region10: #{sae_network_forward.1} parent=5 // pred_check_branch
      %342 = sbr.rel (%p339) target = $region12
    $region11: #{sae_network_forward.1} parent=5 // pred_region
      %s343 = ssub.s32 %s20, 1
      // Predicated region
      $region13: #{sae_network_forward.1} parent=11 // pred_check
        %p344 = pneg %p67
      $region14: #{sae_network_forward.1} parent=11 // pred_check_branch
        %346 = sbr.rel (%p344) target = $region16
      $region15: #{sae_network_forward.1} parent=11 // pred_region
        _
      $region16: #{sae_network_forward.1} parent=11 // pred_fallthru
        _
      // Predicated region
      $region17: #{sae_network_forward.1} parent=11 // pred_check
        %p347 = pneg %p88
      $region18: #{sae_network_forward.1} parent=11 // pred_check_branch
        %349 = sbr.rel (%p347) target = $region20
      $region19: #{sae_network_forward.1} parent=11 // pred_region
        _
      $region20: #{sae_network_forward.1} parent=11 // pred_fallthru
        _
      // Predicated region
      $region21: #{sae_network_forward.1} parent=11 // pred_check
        %p350 = pneg %p109
      $region22: #{sae_network_forward.1} parent=11 // pred_check_branch
        %352 = sbr.rel (%p350) target = $region24
      $region23: #{sae_network_forward.1} parent=11 // pred_region
        _
      $region24: #{sae_network_forward.1} parent=11 // pred_fallthru
        _
      // Predicated region
      $region25: #{sae_network_forward.1} parent=11 // pred_check
        %p353 = pneg %p130
      $region26: #{sae_network_forward.1} parent=11 // pred_check_branch
        %355 = sbr.rel (%p353) target = $region28
      $region27: #{sae_network_forward.1} parent=11 // pred_region
        _
      $region28: #{sae_network_forward.1} parent=11 // pred_fallthru
        _
      // Predicated region
      $region29: #{sae_network_forward.1} parent=11 // pred_check
        %p356 = pneg %p151
      $region30: #{sae_network_forward.1} parent=11 // pred_check_branch
        %358 = sbr.rel (%p356) target = $region32
      $region31: #{sae_network_forward.1} parent=11 // pred_region
        _
      $region32: #{sae_network_forward.1} parent=11 // pred_fallthru
        _
      // Predicated region
      $region33: #{sae_network_forward.1} parent=11 // pred_check
        %p359 = pneg %p172
      $region34: #{sae_network_forward.1} parent=11 // pred_check_branch
        %361 = sbr.rel (%p359) target = $region36
      $region35: #{sae_network_forward.1} parent=11 // pred_region
        _
      $region36: #{sae_network_forward.1} parent=11 // pred_fallthru
        _
      // Predicated region
      $region37: #{sae_network_forward.1} parent=11 // pred_check
        %p362 = pneg %p193
      $region38: #{sae_network_forward.1} parent=11 // pred_check_branch
        %364 = sbr.rel (%p362) target = $region40
      $region39: #{sae_network_forward.1} parent=11 // pred_region
        _
      $region40: #{sae_network_forward.1} parent=11 // pred_fallthru
        _
      // Predicated region
      $region41: #{sae_network_forward.1} parent=11 // pred_check
        %p365 = pneg %p214
      $region42: #{sae_network_forward.1} parent=11 // pred_check_branch
        %367 = sbr.rel (%p365) target = $region44
      $region43: #{sae_network_forward.1} parent=11 // pred_region
        _
      $region44: #{sae_network_forward.1} parent=11 // pred_fallthru
        _
      // Predicated region
      $region45: #{sae_network_forward.1} parent=11 // pred_check
        %p368 = pneg %p235
      $region46: #{sae_network_forward.1} parent=11 // pred_check_branch
        %370 = sbr.rel (%p368) target = $region48
      $region47: #{sae_network_forward.1} parent=11 // pred_region
        _
      $region48: #{sae_network_forward.1} parent=11 // pred_fallthru
        _
      // Predicated region
      $region49: #{sae_network_forward.1} parent=11 // pred_check
        %p371 = pneg %p256
      $region50: #{sae_network_forward.1} parent=11 // pred_check_branch
        %373 = sbr.rel (%p371) target = $region52
      $region51: #{sae_network_forward.1} parent=11 // pred_region
        _
      $region52: #{sae_network_forward.1} parent=11 // pred_fallthru
        _
      // Predicated region
      $region53: #{sae_network_forward.1} parent=11 // pred_check
        %p374 = pneg %p277
      $region54: #{sae_network_forward.1} parent=11 // pred_check_branch
        %376 = sbr.rel (%p374) target = $region56
      $region55: #{sae_network_forward.1} parent=11 // pred_region
        _
      $region56: #{sae_network_forward.1} parent=11 // pred_fallthru
        _
    $region12: #{sae_network_forward.1} parent=5 // pred_fallthru
      _
    %p377 = scmp.lt.s32.totalorder %s20, 2
    // Predicated region
    $region57: #{sae_network_forward.1} parent=5 // pred_check
      %p378 = pneg %p377
    $region58: #{sae_network_forward.1} parent=5 // pred_check_branch
      %380 = sbr.rel (%p378) target = $region60
    $region59: #{sae_network_forward.1} parent=5 // pred_region
      // Predicated region
      $region61: #{sae_network_forward.1} parent=59 // pred_check
        %p381 = pneg %p40
      $region62: #{sae_network_forward.1} parent=59 // pred_check_branch
        %383 = sbr.rel (%p381) target = $region64
      $region63: #{sae_network_forward.1} parent=59 // pred_region
        %s384 = smul.u32 16, %s20
        %p385 = scmp.lt.s32.totalorder %s384, 31
        %s386 = scalar_select %p385, %s384, 31
        %s387 = smul.addr %s386, 4
        %s388 = scalar_lea.vmem %s0, %s387
        %s389 = smul.u32 16, %s20
      $region64: #{sae_network_forward.1} parent=59 // pred_fallthru
        _
    $region60: #{sae_network_forward.1} parent=5 // pred_fallthru
      _
    %p390 = scmp.le.s32.totalorder 1, %s20
    %p391 = scmp.lt.s32.totalorder %s20, 3
    %p392 = pnand %p390, %p391
    %p393 = pneg %p392
    // Predicated region
    $region65: #{sae_network_forward.1} parent=5 // pred_check
      _
    $region66: #{sae_network_forward.1} parent=5 // pred_check_branch
      %395 = sbr.rel (%p392) target = $region68
    $region67: #{sae_network_forward.1} parent=5 // pred_region
      %s396 = ssub.s32 %s20, 1
      %s397 = smul.u32 16, %s25
      %p398 = scmp.lt.s32.totalorder %s397, 31
      %s399 = scalar_select %p398, %s397, 31
      %s400 = smul.addr %s399, 4
      %s401 = scalar_lea.vmem %s0, %s400
      %p402 = pneg %p46
      %p403 = pneg %p43
      %p404 = pneg %p67
      %p405 = pneg %p64
      %p406 = pneg %p88
      %p407 = pneg %p85
      %p408 = pneg %p109
      %p409 = pneg %p106
      %p410 = pneg %p130
      %p411 = pneg %p127
      %p412 = pneg %p151
      %p413 = pneg %p148
      %p414 = pneg %p172
      %p415 = pneg %p169
      %p416 = pneg %p193
      %p417 = pneg %p190
      %p418 = pneg %p214
      %p419 = pneg %p211
      %p420 = pneg %p235
      %p421 = pneg %p232
      %p422 = pneg %p256
      %p423 = pneg %p253
      %p424 = pneg %p277
      %p425 = pneg %p274
      %p426 = pneg %p303
      %p427 = pneg %p300
      %s428 = smul.u32 16, %s25
      %p429 = scmp.lt.s32.totalorder %s428, 31
      %s430 = scalar_select %p429, %s428, 31
      %s431 = smul.addr %s430, 8
      %s432 = scalar_lea.vmem %s12, %s431
      %p433 = pneg %p329
      %p434 = pneg %p326
      %s435 = smul.u32 16, %s25
      %p436 = scmp.lt.s32.totalorder %s435, 31
      %s437 = scalar_select %p436, %s435, 31
      %s438 = smul.addr %s437, 2
      %s439 = smul.addr %s438, 8
      %s440 = scalar_lea.vmem %s13, %s439
      %s441 = smul.u32 16, %s25
      %p442 = scmp.lt.s32.totalorder %s441, 31
      %s443 = scalar_select %p442, %s441, 31
      %s444 = smul.addr %s443, 4
      %s445 = scalar_lea.vmem %s0, %s444
      %s446 = smul.u32 16, %s25
      %s447 = smul.u32 16, %s25
      %p448 = scmp.lt.s32.totalorder %s447, 31
      %s449 = scalar_select %p448, %s447, 31
      %s450 = smul.addr %s449, 8
      %s451 = scalar_lea.vmem %s12, %s450
      %s452 = smul.u32 16, %s25
      %s453 = smul.u32 16, %s25
      %p454 = scmp.lt.s32.totalorder %s453, 31
      %s455 = scalar_select %p454, %s453, 31
      %s456 = smul.addr %s455, 2
      %s457 = smul.addr %s456, 8
      %s458 = scalar_lea.vmem %s13, %s457
      %s459 = smul.u32 16, %s25
      %v460 = vld [vmem:[%s445] sm:$0xf]
      %v461 = vld [vmem:[%s445 + $0x4] sm:$0xf]
      %v462 = vld [vmem:[%s445 + $0x8] sm:$0xf]
      %v463 = vld [vmem:[%s445 + $0xc] sm:$0xf]
      %v464 = vld [vmem:[%s445 + $0x10] sm:$0xf]
      %v465 = vld [vmem:[%s445 + $0x14] sm:$0xf]
      %v466 = vld [vmem:[%s445 + $0x18] sm:$0xf]
      %v467 = vld [vmem:[%s445 + $0x1c] sm:$0xf]
      %v468 = vld [vmem:[%s445 + $0x20] sm:$0xf]
      %v469 = vld [vmem:[%s445 + $0x24] sm:$0xf]
      %v470 = vld [vmem:[%s445 + $0x28] sm:$0xf]
      %v471 = vld [vmem:[%s445 + $0x2c] sm:$0xf]
      %v472 = vld [vmem:[%s445 + $0x30] sm:$0xf]
      %v473 = vld [vmem:[%s445 + $0x34] sm:$0xf]
      %v474 = vld [vmem:[%s445 + $0x38] sm:$0xf]
      %v475 = vld [vmem:[%s445 + $0x3c] sm:$0xf]
      %v476 = vld [vmem:[%s1] sm:$0xf]
      %v477 = vld [vmem:[%s1 + $0x4] sm:$0xf]
      %v478 = vld [vmem:[%s1 + $0x8] sm:$0xf]
      %v479 = vld [vmem:[%s1 + $0xc] sm:$0xf]
      %v480 = vld [vmem:[%s1 + $0x10] sm:$0xf]
      %v481 = vld [vmem:[%s1 + $0x14] sm:$0xf]
      %v482 = vld [vmem:[%s1 + $0x18] sm:$0xf]
      %v483 = vld [vmem:[%s1 + $0x1c] sm:$0xf]
      %v484 = vld [vmem:[%s1 + $0x20] sm:$0xf]
      %v485 = vld [vmem:[%s1 + $0x24] sm:$0xf]
      %v486 = vld [vmem:[%s1 + $0x28] sm:$0xf]
      %v487 = vld [vmem:[%s1 + $0x2c] sm:$0xf]
      %v488 = vld [vmem:[%s1 + $0x30] sm:$0xf]
      %v489 = vld [vmem:[%s1 + $0x34] sm:$0xf]
      %v490 = vld [vmem:[%s1 + $0x38] sm:$0xf]
      %v491 = vld [vmem:[%s1 + $0x3c] sm:$0xf]
      %v492 = vld [vmem:[%s2] sm:$0x1]
      %v494 = vperm.slane %v492, 0
      %v512 = vunpack.c.l.b16 %v460
      %v513 = vunpack.c.l.b16 %v461
      %v514 = vunpack.c.l.b16 %v462
      %v515 = vunpack.c.l.b16 %v463
      %v516 = vunpack.c.l.b16 %v464
      %v517 = vunpack.c.l.b16 %v465
      %v518 = vunpack.c.l.b16 %v466
      %v519 = vunpack.c.l.b16 %v467
      %v520 = vunpack.c.l.b16 %v468
      %v521 = vunpack.c.l.b16 %v469
      %v522 = vunpack.c.l.b16 %v470
      %v523 = vunpack.c.l.b16 %v471
      %v524 = vunpack.c.l.b16 %v472
      %v525 = vunpack.c.l.b16 %v473
      %v526 = vunpack.c.l.b16 %v474
      %v527 = vunpack.c.l.b16 %v475
      %v528 = vpack.c.b16 %v513, %v512
      %v529 = vpack.c.b16 %v515, %v514
      %v530 = vpack.c.b16 %v517, %v516
      %v531 = vpack.c.b16 %v519, %v518
      %v532 = vpack.c.b16 %v521, %v520
      %v533 = vpack.c.b16 %v523, %v522
      %v534 = vpack.c.b16 %v525, %v524
      %v535 = vpack.c.b16 %v527, %v526
      %v560 = vunpack.c.l.b16 %v476
      %v561 = vunpack.c.l.b16 %v477
      %v562 = vunpack.c.l.b16 %v478
      %v563 = vunpack.c.l.b16 %v479
      %v564 = vunpack.c.l.b16 %v480
      %v565 = vunpack.c.l.b16 %v481
      %v566 = vunpack.c.l.b16 %v482
      %v567 = vunpack.c.l.b16 %v483
      %v568 = vunpack.c.l.b16 %v484
      %v569 = vunpack.c.l.b16 %v485
      %v570 = vunpack.c.l.b16 %v486
      %v571 = vunpack.c.l.b16 %v487
      %v572 = vunpack.c.l.b16 %v488
      %v573 = vunpack.c.l.b16 %v489
      %v574 = vunpack.c.l.b16 %v490
      %v575 = vunpack.c.l.b16 %v491
      %v576 = vpack.c.b16 %v561, %v560
      %v577 = vpack.c.b16 %v563, %v562
      %v578 = vpack.c.b16 %v565, %v564
      %v579 = vpack.c.b16 %v567, %v566
      %v580 = vpack.c.b16 %v569, %v568
      %v581 = vpack.c.b16 %v571, %v570
      %v582 = vpack.c.b16 %v573, %v572
      %v583 = vpack.c.b16 %v575, %v574
      %592 = vmatpush.bf16.msra.mxu0 %v583
      %593 = vmatpush.bf16.msra.mxu0 %v582
      %594 = vmatpush.bf16.msra.mxu0 %v581
      %595 = vmatpush.bf16.msra.mxu0 %v580
      %596 = vmatpush.bf16.msra.mxu0 %v579
      %597 = vmatpush.bf16.msra.mxu0 %v578
      %598 = vmatpush.bf16.msra.mxu0 %v577
      %599 = vmatpush.bf16.msra.mxu0 %v576
      %600 = vmatmul.bf16.gmra.mxu0 %v528
      %v601 = vpop.f32.mrf.mxu0
      %v602 = vadd.f32 %v494, %v601
      %v603 = vpop.f32.mrf.mxu0
      %v604 = vadd.f32 %v494, %v603
      %605 = vmatmul.bf16.gmra.mxu0 %v529
      %v606 = vpop.f32.mrf.mxu0
      %v607 = vadd.f32 %v494, %v606
      %v608 = vpop.f32.mrf.mxu0
      %v609 = vadd.f32 %v494, %v608
      %610 = vmatmul.bf16.gmra.mxu0 %v530
      %v611 = vpop.f32.mrf.mxu0
      %v612 = vadd.f32 %v494, %v611
      %v613 = vpop.f32.mrf.mxu0
      %v614 = vadd.f32 %v494, %v613
      %615 = vmatmul.bf16.gmra.mxu0 %v531
      %v616 = vpop.f32.mrf.mxu0
      %v617 = vadd.f32 %v494, %v616
      %v618 = vpop.f32.mrf.mxu0
      %v619 = vadd.f32 %v494, %v618
      %620 = vmatmul.bf16.gmra.mxu0 %v532
      %v621 = vpop.f32.mrf.mxu0
      %v622 = vadd.f32 %v494, %v621
      %v623 = vpop.f32.mrf.mxu0
      %v624 = vadd.f32 %v494, %v623
      %625 = vmatmul.bf16.gmra.mxu0 %v533
      %v626 = vpop.f32.mrf.mxu0
      %v627 = vadd.f32 %v494, %v626
      %v628 = vpop.f32.mrf.mxu0
      %v629 = vadd.f32 %v494, %v628
      %630 = vmatmul.bf16.gmra.mxu0 %v534
      %v631 = vpop.f32.mrf.mxu0
      %v632 = vadd.f32 %v494, %v631
      %v633 = vpop.f32.mrf.mxu0
      %v634 = vadd.f32 %v494, %v633
      %635 = vmatmul.bf16.gmra.mxu0 %v535
      %v636 = vpop.f32.mrf.mxu0
      %v637 = vadd.f32 %v494, %v636
      %v638 = vpop.f32.mrf.mxu0
      %v639 = vadd.f32 %v494, %v638
      %640 = vdwg.mxu0
      %v641 = vmax.f32 %v602, 0.0
      %v642 = vmax.f32 %v604, 0.0
      %v643 = vmax.f32 %v607, 0.0
      %v644 = vmax.f32 %v609, 0.0
      %v645 = vmax.f32 %v612, 0.0
      %v646 = vmax.f32 %v614, 0.0
      %v647 = vmax.f32 %v617, 0.0
      %v648 = vmax.f32 %v619, 0.0
      %v649 = vmax.f32 %v622, 0.0
      %v650 = vmax.f32 %v624, 0.0
      %v651 = vmax.f32 %v627, 0.0
      %v652 = vmax.f32 %v629, 0.0
      %v653 = vmax.f32 %v632, 0.0
      %v654 = vmax.f32 %v634, 0.0
      %v655 = vmax.f32 %v637, 0.0
      %v656 = vmax.f32 %v639, 0.0
      %v657 = vpack.c.bf16 %v642, %v641
      %v658 = vpack.c.bf16 %v644, %v643
      %v659 = vpack.c.bf16 %v646, %v645
      %v660 = vpack.c.bf16 %v648, %v647
      %v661 = vpack.c.bf16 %v650, %v649
      %v662 = vpack.c.bf16 %v652, %v651
      %v663 = vpack.c.bf16 %v654, %v653
      %v664 = vpack.c.bf16 %v656, %v655
      %v665 = vld [vmem:[%s3] sm:$0xff]
      %v666 = vld [vmem:[%s3 + $0x8] sm:$0xff]
      %v667 = vld [vmem:[%s3 + $0x10] sm:$0xff]
      %v668 = vld [vmem:[%s3 + $0x18] sm:$0xff]
      %v669 = vld [vmem:[%s3 + $0x20] sm:$0xff]
      %v670 = vld [vmem:[%s3 + $0x28] sm:$0xff]
      %v671 = vld [vmem:[%s3 + $0x30] sm:$0xff]
      %v672 = vld [vmem:[%s3 + $0x38] sm:$0xff]
      %v673 = vld [vmem:[%s3 + $0x40] sm:$0xff]
      %v674 = vld [vmem:[%s3 + $0x48] sm:$0xff]
      %v675 = vld [vmem:[%s3 + $0x50] sm:$0xff]
      %v676 = vld [vmem:[%s3 + $0x58] sm:$0xff]
      %v677 = vld [vmem:[%s3 + $0x60] sm:$0xff]
      %v678 = vld [vmem:[%s3 + $0x68] sm:$0xff]
      %v679 = vld [vmem:[%s3 + $0x70] sm:$0xff]
      %v680 = vld [vmem:[%s3 + $0x78] sm:$0xff]
      %v681 = vld [vmem:[%s4] sm:$0x3]
      %v683 = vperm.slane %v681, 0
      %v684 = vperm.slane %v681, 1
      %v703 = vunpack.c.l.b16 %v665
      %v704 = vunpack.c.h.b16 %v665
      %v705 = vunpack.c.l.b16 %v666
      %v706 = vunpack.c.h.b16 %v666
      %v707 = vunpack.c.l.b16 %v667
      %v708 = vunpack.c.h.b16 %v667
      %v709 = vunpack.c.l.b16 %v668
      %v710 = vunpack.c.h.b16 %v668
      %v711 = vunpack.c.l.b16 %v669
      %v712 = vunpack.c.h.b16 %v669
      %v713 = vunpack.c.l.b16 %v670
      %v714 = vunpack.c.h.b16 %v670
      %v715 = vunpack.c.l.b16 %v671
      %v716 = vunpack.c.h.b16 %v671
      %v717 = vunpack.c.l.b16 %v672
      %v718 = vunpack.c.h.b16 %v672
      %v719 = vunpack.c.l.b16 %v673
      %v720 = vunpack.c.h.b16 %v673
      %v721 = vunpack.c.l.b16 %v674
      %v722 = vunpack.c.h.b16 %v674
      %v723 = vunpack.c.l.b16 %v675
      %v724 = vunpack.c.h.b16 %v675
      %v725 = vunpack.c.l.b16 %v676
      %v726 = vunpack.c.h.b16 %v676
      %v727 = vunpack.c.l.b16 %v677
      %v728 = vunpack.c.h.b16 %v677
      %v729 = vunpack.c.l.b16 %v678
      %v730 = vunpack.c.h.b16 %v678
      %v731 = vunpack.c.l.b16 %v679
      %v732 = vunpack.c.h.b16 %v679
      %v733 = vunpack.c.l.b16 %v680
      %v734 = vunpack.c.h.b16 %v680
      %v735 = vpack.c.b16 %v705, %v703
      %v736 = vpack.c.b16 %v706, %v704
      %v737 = vpack.c.b16 %v709, %v707
      %v738 = vpack.c.b16 %v710, %v708
      %v739 = vpack.c.b16 %v713, %v711
      %v740 = vpack.c.b16 %v714, %v712
      %v741 = vpack.c.b16 %v717, %v715
      %v742 = vpack.c.b16 %v718, %v716
      %v743 = vpack.c.b16 %v721, %v719
      %v744 = vpack.c.b16 %v722, %v720
      %v745 = vpack.c.b16 %v725, %v723
      %v746 = vpack.c.b16 %v726, %v724
      %v747 = vpack.c.b16 %v729, %v727
      %v748 = vpack.c.b16 %v730, %v728
      %v749 = vpack.c.b16 %v733, %v731
      %v750 = vpack.c.b16 %v734, %v732
      %767 = vmatpush.bf16.msra.mxu0 %v749
      %768 = vmatpush.bf16.msra.mxu0 %v747
      %769 = vmatpush.bf16.msra.mxu0 %v745
      %770 = vmatpush.bf16.msra.mxu0 %v743
      %771 = vmatpush.bf16.msra.mxu0 %v741
      %772 = vmatpush.bf16.msra.mxu0 %v739
      %773 = vmatpush.bf16.msra.mxu0 %v737
      %774 = vmatpush.bf16.msra.mxu0 %v735
      %775 = vmatmul.bf16.gmra.mxu0 %v657
      %v776 = vpop.f32.mrf.mxu0
      %v777 = vadd.f32 %v683, %v776
      %v778 = vpop.f32.mrf.mxu0
      %v779 = vadd.f32 %v683, %v778
      %780 = vmatmul.bf16.gmra.mxu0 %v658
      %v781 = vpop.f32.mrf.mxu0
      %v782 = vadd.f32 %v683, %v781
      %v783 = vpop.f32.mrf.mxu0
      %v784 = vadd.f32 %v683, %v783
      %785 = vmatmul.bf16.gmra.mxu0 %v659
      %v786 = vpop.f32.mrf.mxu0
      %v787 = vadd.f32 %v683, %v786
      %v788 = vpop.f32.mrf.mxu0
      %v789 = vadd.f32 %v683, %v788
      %790 = vmatmul.bf16.gmra.mxu0 %v660
      %v791 = vpop.f32.mrf.mxu0
      %v792 = vadd.f32 %v683, %v791
      %v793 = vpop.f32.mrf.mxu0
      %v794 = vadd.f32 %v683, %v793
      %795 = vmatmul.bf16.gmra.mxu0 %v661
      %v796 = vpop.f32.mrf.mxu0
      %v797 = vadd.f32 %v683, %v796
      %v798 = vpop.f32.mrf.mxu0
      %v799 = vadd.f32 %v683, %v798
      %800 = vmatmul.bf16.gmra.mxu0 %v662
      %v801 = vpop.f32.mrf.mxu0
      %v802 = vadd.f32 %v683, %v801
      %v803 = vpop.f32.mrf.mxu0
      %v804 = vadd.f32 %v683, %v803
      %805 = vmatmul.bf16.gmra.mxu0 %v663
      %v806 = vpop.f32.mrf.mxu0
      %v807 = vadd.f32 %v683, %v806
      %v808 = vpop.f32.mrf.mxu0
      %v809 = vadd.f32 %v683, %v808
      %810 = vmatmul.bf16.gmra.mxu0 %v664
      %v811 = vpop.f32.mrf.mxu0
      %v812 = vadd.f32 %v683, %v811
      %v813 = vpop.f32.mrf.mxu0
      %v814 = vadd.f32 %v683, %v813
      %815 = vdwg.mxu0
      %816 = vmatpush.bf16.msra.mxu0 %v750
      %817 = vmatpush.bf16.msra.mxu0 %v748
      %818 = vmatpush.bf16.msra.mxu0 %v746
      %819 = vmatpush.bf16.msra.mxu0 %v744
      %820 = vmatpush.bf16.msra.mxu0 %v742
      %821 = vmatpush.bf16.msra.mxu0 %v740
      %822 = vmatpush.bf16.msra.mxu0 %v738
      %823 = vmatpush.bf16.msra.mxu0 %v736
      %824 = vmatmul.bf16.gmra.mxu0 %v657
      %v825 = vpop.f32.mrf.mxu0
      %v826 = vadd.f32 %v684, %v825
      %v827 = vpop.f32.mrf.mxu0
      %v828 = vadd.f32 %v684, %v827
      %829 = vmatmul.bf16.gmra.mxu0 %v658
      %v830 = vpop.f32.mrf.mxu0
      %v831 = vadd.f32 %v684, %v830
      %v832 = vpop.f32.mrf.mxu0
      %v833 = vadd.f32 %v684, %v832
      %834 = vmatmul.bf16.gmra.mxu0 %v659
      %v835 = vpop.f32.mrf.mxu0
      %v836 = vadd.f32 %v684, %v835
      %v837 = vpop.f32.mrf.mxu0
      %v838 = vadd.f32 %v684, %v837
      %839 = vmatmul.bf16.gmra.mxu0 %v660
      %v840 = vpop.f32.mrf.mxu0
      %v841 = vadd.f32 %v684, %v840
      %v842 = vpop.f32.mrf.mxu0
      %v843 = vadd.f32 %v684, %v842
      %844 = vmatmul.bf16.gmra.mxu0 %v661
      %v845 = vpop.f32.mrf.mxu0
      %v846 = vadd.f32 %v684, %v845
      %v847 = vpop.f32.mrf.mxu0
      %v848 = vadd.f32 %v684, %v847
      %849 = vmatmul.bf16.gmra.mxu0 %v662
      %v850 = vpop.f32.mrf.mxu0
      %v851 = vadd.f32 %v684, %v850
      %v852 = vpop.f32.mrf.mxu0
      %v853 = vadd.f32 %v684, %v852
      %854 = vmatmul.bf16.gmra.mxu0 %v663
      %v855 = vpop.f32.mrf.mxu0
      %v856 = vadd.f32 %v684, %v855
      %v857 = vpop.f32.mrf.mxu0
      %v858 = vadd.f32 %v684, %v857
      %859 = vmatmul.bf16.gmra.mxu0 %v664
      %v860 = vpop.f32.mrf.mxu0
      %v861 = vadd.f32 %v684, %v860
      %v862 = vpop.f32.mrf.mxu0
      %v863 = vadd.f32 %v684, %v862
      %864 = vdwg.mxu0
      %v865 = vmax.f32 %v777, 0.0
      %v866 = vmax.f32 %v826, 0.0
      %v867 = vmax.f32 %v779, 0.0
      %v868 = vmax.f32 %v828, 0.0
      %v869 = vmax.f32 %v782, 0.0
      %v870 = vmax.f32 %v831, 0.0
      %v871 = vmax.f32 %v784, 0.0
      %v872 = vmax.f32 %v833, 0.0
      %v873 = vmax.f32 %v787, 0.0
      %v874 = vmax.f32 %v836, 0.0
      %v875 = vmax.f32 %v789, 0.0
      %v876 = vmax.f32 %v838, 0.0
      %v877 = vmax.f32 %v792, 0.0
      %v878 = vmax.f32 %v841, 0.0
      %v879 = vmax.f32 %v794, 0.0
      %v880 = vmax.f32 %v843, 0.0
      %v881 = vmax.f32 %v797, 0.0
      %v882 = vmax.f32 %v846, 0.0
      %v883 = vmax.f32 %v799, 0.0
      %v884 = vmax.f32 %v848, 0.0
      %v885 = vmax.f32 %v802, 0.0
      %v886 = vmax.f32 %v851, 0.0
      %v887 = vmax.f32 %v804, 0.0
      %v888 = vmax.f32 %v853, 0.0
      %v889 = vmax.f32 %v807, 0.0
      %v890 = vmax.f32 %v856, 0.0
      %v891 = vmax.f32 %v809, 0.0
      %v892 = vmax.f32 %v858, 0.0
      %v893 = vmax.f32 %v812, 0.0
      %v894 = vmax.f32 %v861, 0.0
      %v895 = vmax.f32 %v814, 0.0
      %v896 = vmax.f32 %v863, 0.0
      %v897 = vld [vmem:[%s7] sm:$0x3]
      %v899 = vperm.slane %v897, 0
      %v900 = vperm.slane %v897, 1
      %v903 = vmul.f32 %v865, %v899
      %v904 = vmul.f32 %v866, %v900
      %v905 = vmul.f32 %v867, %v899
      %v906 = vmul.f32 %v868, %v900
      %v907 = vmul.f32 %v869, %v899
      %v908 = vmul.f32 %v870, %v900
      %v909 = vmul.f32 %v871, %v899
      %v910 = vmul.f32 %v872, %v900
      %v911 = vmul.f32 %v873, %v899
      %v912 = vmul.f32 %v874, %v900
      %v913 = vmul.f32 %v875, %v899
      %v914 = vmul.f32 %v876, %v900
      %v915 = vmul.f32 %v877, %v899
      %v916 = vmul.f32 %v878, %v900
      %v917 = vmul.f32 %v879, %v899
      %v918 = vmul.f32 %v880, %v900
      %v919 = vmul.f32 %v881, %v899
      %v920 = vmul.f32 %v882, %v900
      %v921 = vmul.f32 %v883, %v899
      %v922 = vmul.f32 %v884, %v900
      %v923 = vmul.f32 %v885, %v899
      %v924 = vmul.f32 %v886, %v900
      %v925 = vmul.f32 %v887, %v899
      %v926 = vmul.f32 %v888, %v900
      %v927 = vmul.f32 %v889, %v899
      %v928 = vmul.f32 %v890, %v900
      %v929 = vmul.f32 %v891, %v899
      %v930 = vmul.f32 %v892, %v900
      %v931 = vmul.f32 %v893, %v899
      %v932 = vmul.f32 %v894, %v900
      %v933 = vmul.f32 %v895, %v899
      %v934 = vmul.f32 %v896, %v900
      %935 = vst [vmem:[%s458] sm:$0xff] %v903
      %936 = vst [vmem:[%s458 + $0x8] sm:$0xff] %v904
      %937 = vst [vmem:[%s458 + $0x10] sm:$0xff] %v905
      %938 = vst [vmem:[%s458 + $0x18] sm:$0xff] %v906
      %939 = vst [vmem:[%s458 + $0x20] sm:$0xff] %v907
      %940 = vst [vmem:[%s458 + $0x28] sm:$0xff] %v908
      %941 = vst [vmem:[%s458 + $0x30] sm:$0xff] %v909
      %942 = vst [vmem:[%s458 + $0x38] sm:$0xff] %v910
      %943 = vst [vmem:[%s458 + $0x40] sm:$0xff] %v911
      %944 = vst [vmem:[%s458 + $0x48] sm:$0xff] %v912
      %945 = vst [vmem:[%s458 + $0x50] sm:$0xff] %v913
      %946 = vst [vmem:[%s458 + $0x58] sm:$0xff] %v914
      %947 = vst [vmem:[%s458 + $0x60] sm:$0xff] %v915
      %948 = vst [vmem:[%s458 + $0x68] sm:$0xff] %v916
      %949 = vst [vmem:[%s458 + $0x70] sm:$0xff] %v917
      %950 = vst [vmem:[%s458 + $0x78] sm:$0xff] %v918
      %951 = vst [vmem:[%s458 + $0x80] sm:$0xff] %v919
      %952 = vst [vmem:[%s458 + $0x88] sm:$0xff] %v920
      %953 = vst [vmem:[%s458 + $0x90] sm:$0xff] %v921
      %954 = vst [vmem:[%s458 + $0x98] sm:$0xff] %v922
      %955 = vst [vmem:[%s458 + $0xa0] sm:$0xff] %v923
      %956 = vst [vmem:[%s458 + $0xa8] sm:$0xff] %v924
      %957 = vst [vmem:[%s458 + $0xb0] sm:$0xff] %v925
      %958 = vst [vmem:[%s458 + $0xb8] sm:$0xff] %v926
      %959 = vst [vmem:[%s458 + $0xc0] sm:$0xff] %v927
      %960 = vst [vmem:[%s458 + $0xc8] sm:$0xff] %v928
      %961 = vst [vmem:[%s458 + $0xd0] sm:$0xff] %v929
      %962 = vst [vmem:[%s458 + $0xd8] sm:$0xff] %v930
      %963 = vst [vmem:[%s458 + $0xe0] sm:$0xff] %v931
      %964 = vst [vmem:[%s458 + $0xe8] sm:$0xff] %v932
      %965 = vst [vmem:[%s458 + $0xf0] sm:$0xff] %v933
      %966 = vst [vmem:[%s458 + $0xf8] sm:$0xff] %v934
      %v967 = vpack.c.bf16 %v905, %v903
      %v968 = vpack.c.bf16 %v906, %v904
      %v969 = vpack.c.bf16 %v909, %v907
      %v970 = vpack.c.bf16 %v910, %v908
      %v971 = vpack.c.bf16 %v913, %v911
      %v972 = vpack.c.bf16 %v914, %v912
      %v973 = vpack.c.bf16 %v917, %v915
      %v974 = vpack.c.bf16 %v918, %v916
      %v975 = vpack.c.bf16 %v921, %v919
      %v976 = vpack.c.bf16 %v922, %v920
      %v977 = vpack.c.bf16 %v925, %v923
      %v978 = vpack.c.bf16 %v926, %v924
      %v979 = vpack.c.bf16 %v929, %v927
      %v980 = vpack.c.bf16 %v930, %v928
      %v981 = vpack.c.bf16 %v933, %v931
      %v982 = vpack.c.bf16 %v934, %v932
      %v983 = vld [vmem:[%s5] sm:$0xf]
      %v984 = vld [vmem:[%s5 + $0x4] sm:$0xf]
      %v985 = vld [vmem:[%s5 + $0x8] sm:$0xf]
      %v986 = vld [vmem:[%s5 + $0xc] sm:$0xf]
      %v987 = vld [vmem:[%s5 + $0x10] sm:$0xf]
      %v988 = vld [vmem:[%s5 + $0x14] sm:$0xf]
      %v989 = vld [vmem:[%s5 + $0x18] sm:$0xf]
      %v990 = vld [vmem:[%s5 + $0x1c] sm:$0xf]
      %v991 = vld [vmem:[%s5 + $0x20] sm:$0xf]
      %v992 = vld [vmem:[%s5 + $0x24] sm:$0xf]
      %v993 = vld [vmem:[%s5 + $0x28] sm:$0xf]
      %v994 = vld [vmem:[%s5 + $0x2c] sm:$0xf]
      %v995 = vld [vmem:[%s5 + $0x30] sm:$0xf]
      %v996 = vld [vmem:[%s5 + $0x34] sm:$0xf]
      %v997 = vld [vmem:[%s5 + $0x38] sm:$0xf]
      %v998 = vld [vmem:[%s5 + $0x3c] sm:$0xf]
      %v999 = vld [vmem:[%s5 + $0x40] sm:$0xf]
      %v1000 = vld [vmem:[%s5 + $0x44] sm:$0xf]
      %v1001 = vld [vmem:[%s5 + $0x48] sm:$0xf]
      %v1002 = vld [vmem:[%s5 + $0x4c] sm:$0xf]
      %v1003 = vld [vmem:[%s5 + $0x50] sm:$0xf]
      %v1004 = vld [vmem:[%s5 + $0x54] sm:$0xf]
      %v1005 = vld [vmem:[%s5 + $0x58] sm:$0xf]
      %v1006 = vld [vmem:[%s5 + $0x5c] sm:$0xf]
      %v1007 = vld [vmem:[%s5 + $0x60] sm:$0xf]
      %v1008 = vld [vmem:[%s5 + $0x64] sm:$0xf]
      %v1009 = vld [vmem:[%s5 + $0x68] sm:$0xf]
      %v1010 = vld [vmem:[%s5 + $0x6c] sm:$0xf]
      %v1011 = vld [vmem:[%s5 + $0x70] sm:$0xf]
      %v1012 = vld [vmem:[%s5 + $0x74] sm:$0xf]
      %v1013 = vld [vmem:[%s5 + $0x78] sm:$0xf]
      %v1014 = vld [vmem:[%s5 + $0x7c] sm:$0xf]
      %v1015 = vld [vmem:[%s6] sm:$0x1]
      %v1017 = vperm.slane %v1015, 0
      %v1051 = vunpack.c.l.b16 %v983
      %v1052 = vunpack.c.l.b16 %v984
      %v1053 = vunpack.c.l.b16 %v985
      %v1054 = vunpack.c.l.b16 %v986
      %v1055 = vunpack.c.l.b16 %v987
      %v1056 = vunpack.c.l.b16 %v988
      %v1057 = vunpack.c.l.b16 %v989
      %v1058 = vunpack.c.l.b16 %v990
      %v1059 = vunpack.c.l.b16 %v991
      %v1060 = vunpack.c.l.b16 %v992
      %v1061 = vunpack.c.l.b16 %v993
      %v1062 = vunpack.c.l.b16 %v994
      %v1063 = vunpack.c.l.b16 %v995
      %v1064 = vunpack.c.l.b16 %v996
      %v1065 = vunpack.c.l.b16 %v997
      %v1066 = vunpack.c.l.b16 %v998
      %v1067 = vunpack.c.l.b16 %v999
      %v1068 = vunpack.c.l.b16 %v1000
      %v1069 = vunpack.c.l.b16 %v1001
      %v1070 = vunpack.c.l.b16 %v1002
      %v1071 = vunpack.c.l.b16 %v1003
      %v1072 = vunpack.c.l.b16 %v1004
      %v1073 = vunpack.c.l.b16 %v1005
      %v1074 = vunpack.c.l.b16 %v1006
      %v1075 = vunpack.c.l.b16 %v1007
      %v1076 = vunpack.c.l.b16 %v1008
      %v1077 = vunpack.c.l.b16 %v1009
      %v1078 = vunpack.c.l.b16 %v1010
      %v1079 = vunpack.c.l.b16 %v1011
      %v1080 = vunpack.c.l.b16 %v1012
      %v1081 = vunpack.c.l.b16 %v1013
      %v1082 = vunpack.c.l.b16 %v1014
      %v1083 = vpack.c.b16 %v1052, %v1051
      %v1084 = vpack.c.b16 %v1054, %v1053
      %v1085 = vpack.c.b16 %v1056, %v1055
      %v1086 = vpack.c.b16 %v1058, %v1057
      %v1087 = vpack.c.b16 %v1060, %v1059
      %v1088 = vpack.c.b16 %v1062, %v1061
      %v1089 = vpack.c.b16 %v1064, %v1063
      %v1090 = vpack.c.b16 %v1066, %v1065
      %v1091 = vpack.c.b16 %v1068, %v1067
      %v1092 = vpack.c.b16 %v1070, %v1069
      %v1093 = vpack.c.b16 %v1072, %v1071
      %v1094 = vpack.c.b16 %v1074, %v1073
      %v1095 = vpack.c.b16 %v1076, %v1075
      %v1096 = vpack.c.b16 %v1078, %v1077
      %v1097 = vpack.c.b16 %v1080, %v1079
      %v1098 = vpack.c.b16 %v1082, %v1081
      %1115 = vmatpush.bf16.msra.mxu0 %v1090
      %1116 = vmatpush.bf16.msra.mxu0 %v1089
      %1117 = vmatpush.bf16.msra.mxu0 %v1088
      %1118 = vmatpush.bf16.msra.mxu0 %v1087
      %1119 = vmatpush.bf16.msra.mxu0 %v1086
      %1120 = vmatpush.bf16.msra.mxu0 %v1085
      %1121 = vmatpush.bf16.msra.mxu0 %v1084
      %1122 = vmatpush.bf16.msra.mxu0 %v1083
      %1123 = vmatmul.bf16.gmra.mxu0 %v967
      %v1124 = vpop.f32.mrf.mxu0
      %v1125 = vadd.f32 %v1017, %v1124
      %v1126 = vpop.f32.mrf.mxu0
      %v1127 = vadd.f32 %v1017, %v1126
      %1128 = vmatmul.bf16.gmra.mxu0 %v969
      %v1129 = vpop.f32.mrf.mxu0
      %v1130 = vadd.f32 %v1017, %v1129
      %v1131 = vpop.f32.mrf.mxu0
      %v1132 = vadd.f32 %v1017, %v1131
      %1133 = vmatmul.bf16.gmra.mxu0 %v971
      %v1134 = vpop.f32.mrf.mxu0
      %v1135 = vadd.f32 %v1017, %v1134
      %v1136 = vpop.f32.mrf.mxu0
      %v1137 = vadd.f32 %v1017, %v1136
      %1138 = vmatmul.bf16.gmra.mxu0 %v973
      %v1139 = vpop.f32.mrf.mxu0
      %v1140 = vadd.f32 %v1017, %v1139
      %v1141 = vpop.f32.mrf.mxu0
      %v1142 = vadd.f32 %v1017, %v1141
      %1143 = vmatmul.bf16.gmra.mxu0 %v975
      %v1144 = vpop.f32.mrf.mxu0
      %v1145 = vadd.f32 %v1017, %v1144
      %v1146 = vpop.f32.mrf.mxu0
      %v1147 = vadd.f32 %v1017, %v1146
      %1148 = vmatmul.bf16.gmra.mxu0 %v977
      %v1149 = vpop.f32.mrf.mxu0
      %v1150 = vadd.f32 %v1017, %v1149
      %v1151 = vpop.f32.mrf.mxu0
      %v1152 = vadd.f32 %v1017, %v1151
      %1153 = vmatmul.bf16.gmra.mxu0 %v979
      %v1154 = vpop.f32.mrf.mxu0
      %v1155 = vadd.f32 %v1017, %v1154
      %v1156 = vpop.f32.mrf.mxu0
      %v1157 = vadd.f32 %v1017, %v1156
      %1158 = vmatmul.bf16.gmra.mxu0 %v981
      %v1159 = vpop.f32.mrf.mxu0
      %v1160 = vadd.f32 %v1017, %v1159
      %v1161 = vpop.f32.mrf.mxu0
      %v1162 = vadd.f32 %v1017, %v1161
      %1163 = vdwg.mxu0
      %1164 = vmatpush.bf16.msra.mxu0 %v1098
      %1165 = vmatpush.bf16.msra.mxu0 %v1097
      %1166 = vmatpush.bf16.msra.mxu0 %v1096
      %1167 = vmatpush.bf16.msra.mxu0 %v1095
      %1168 = vmatpush.bf16.msra.mxu0 %v1094
      %1169 = vmatpush.bf16.msra.mxu0 %v1093
      %1170 = vmatpush.bf16.msra.mxu0 %v1092
      %1171 = vmatpush.bf16.msra.mxu0 %v1091
      %1172 = vmatmul.bf16.gmra.mxu0 %v968
      %v1173 = vpop.f32.mrf.mxu0
      %v1174 = vadd.f32 %v1125, %v1173
      %v1175 = vpop.f32.mrf.mxu0
      %v1176 = vadd.f32 %v1127, %v1175
      %1177 = vmatmul.bf16.gmra.mxu0 %v970
      %v1178 = vpop.f32.mrf.mxu0
      %v1179 = vadd.f32 %v1130, %v1178
      %v1180 = vpop.f32.mrf.mxu0
      %v1181 = vadd.f32 %v1132, %v1180
      %1182 = vmatmul.bf16.gmra.mxu0 %v972
      %v1183 = vpop.f32.mrf.mxu0
      %v1184 = vadd.f32 %v1135, %v1183
      %v1185 = vpop.f32.mrf.mxu0
      %v1186 = vadd.f32 %v1137, %v1185
      %1187 = vmatmul.bf16.gmra.mxu0 %v974
      %v1188 = vpop.f32.mrf.mxu0
      %v1189 = vadd.f32 %v1140, %v1188
      %v1190 = vpop.f32.mrf.mxu0
      %v1191 = vadd.f32 %v1142, %v1190
      %1192 = vmatmul.bf16.gmra.mxu0 %v976
      %v1193 = vpop.f32.mrf.mxu0
      %v1194 = vadd.f32 %v1145, %v1193
      %v1195 = vpop.f32.mrf.mxu0
      %v1196 = vadd.f32 %v1147, %v1195
      %1197 = vmatmul.bf16.gmra.mxu0 %v978
      %v1198 = vpop.f32.mrf.mxu0
      %v1199 = vadd.f32 %v1150, %v1198
      %v1200 = vpop.f32.mrf.mxu0
      %v1201 = vadd.f32 %v1152, %v1200
      %1202 = vmatmul.bf16.gmra.mxu0 %v980
      %v1203 = vpop.f32.mrf.mxu0
      %v1204 = vadd.f32 %v1155, %v1203
      %v1205 = vpop.f32.mrf.mxu0
      %v1206 = vadd.f32 %v1157, %v1205
      %1207 = vmatmul.bf16.gmra.mxu0 %v982
      %v1208 = vpop.f32.mrf.mxu0
      %v1209 = vadd.f32 %v1160, %v1208
      %v1210 = vpop.f32.mrf.mxu0
      %v1211 = vadd.f32 %v1162, %v1210
      %1212 = vdwg.mxu0
      %v1213 = vpack.c.bf16 %v1176, %v1174
      %v1214 = vpack.c.bf16 %v1181, %v1179
      %v1215 = vpack.c.bf16 %v1186, %v1184
      %v1216 = vpack.c.bf16 %v1191, %v1189
      %v1217 = vpack.c.bf16 %v1196, %v1194
      %v1218 = vpack.c.bf16 %v1201, %v1199
      %v1219 = vpack.c.bf16 %v1206, %v1204
      %v1220 = vpack.c.bf16 %v1211, %v1209
      %v1221 = vld [vmem:[%s8] sm:$0xf]
      %v1222 = vld [vmem:[%s8 + $0x4] sm:$0xf]
      %v1223 = vld [vmem:[%s8 + $0x8] sm:$0xf]
      %v1224 = vld [vmem:[%s8 + $0xc] sm:$0xf]
      %v1225 = vld [vmem:[%s8 + $0x10] sm:$0xf]
      %v1226 = vld [vmem:[%s8 + $0x14] sm:$0xf]
      %v1227 = vld [vmem:[%s8 + $0x18] sm:$0xf]
      %v1228 = vld [vmem:[%s8 + $0x1c] sm:$0xf]
      %v1229 = vld [vmem:[%s8 + $0x20] sm:$0xf]
      %v1230 = vld [vmem:[%s8 + $0x24] sm:$0xf]
      %v1231 = vld [vmem:[%s8 + $0x28] sm:$0xf]
      %v1232 = vld [vmem:[%s8 + $0x2c] sm:$0xf]
      %v1233 = vld [vmem:[%s8 + $0x30] sm:$0xf]
      %v1234 = vld [vmem:[%s8 + $0x34] sm:$0xf]
      %v1235 = vld [vmem:[%s8 + $0x38] sm:$0xf]
      %v1236 = vld [vmem:[%s8 + $0x3c] sm:$0xf]
      %v1237 = vld [vmem:[%s9] sm:$0x1]
      %v1239 = vperm.slane %v1237, 0
      %v1257 = vunpack.c.l.b16 %v1221
      %v1258 = vunpack.c.l.b16 %v1222
      %v1259 = vunpack.c.l.b16 %v1223
      %v1260 = vunpack.c.l.b16 %v1224
      %v1261 = vunpack.c.l.b16 %v1225
      %v1262 = vunpack.c.l.b16 %v1226
      %v1263 = vunpack.c.l.b16 %v1227
      %v1264 = vunpack.c.l.b16 %v1228
      %v1265 = vunpack.c.l.b16 %v1229
      %v1266 = vunpack.c.l.b16 %v1230
      %v1267 = vunpack.c.l.b16 %v1231
      %v1268 = vunpack.c.l.b16 %v1232
      %v1269 = vunpack.c.l.b16 %v1233
      %v1270 = vunpack.c.l.b16 %v1234
      %v1271 = vunpack.c.l.b16 %v1235
      %v1272 = vunpack.c.l.b16 %v1236
      %v1273 = vpack.c.b16 %v1258, %v1257
      %v1274 = vpack.c.b16 %v1260, %v1259
      %v1275 = vpack.c.b16 %v1262, %v1261
      %v1276 = vpack.c.b16 %v1264, %v1263
      %v1277 = vpack.c.b16 %v1266, %v1265
      %v1278 = vpack.c.b16 %v1268, %v1267
      %v1279 = vpack.c.b16 %v1270, %v1269
      %v1280 = vpack.c.b16 %v1272, %v1271
      %1289 = vmatpush.bf16.msra.mxu0 %v1280
      %1290 = vmatpush.bf16.msra.mxu0 %v1279
      %1291 = vmatpush.bf16.msra.mxu0 %v1278
      %1292 = vmatpush.bf16.msra.mxu0 %v1277
      %1293 = vmatpush.bf16.msra.mxu0 %v1276
      %1294 = vmatpush.bf16.msra.mxu0 %v1275
      %1295 = vmatpush.bf16.msra.mxu0 %v1274
      %1296 = vmatpush.bf16.msra.mxu0 %v1273
      %1297 = vmatmul.bf16.gmra.mxu0 %v1213
      %v1298 = vpop.f32.mrf.mxu0
      %v1299 = vadd.f32 %v1239, %v1298
      %v1300 = vpop.f32.mrf.mxu0
      %v1301 = vadd.f32 %v1239, %v1300
      %1302 = vmatmul.bf16.gmra.mxu0 %v1214
      %v1303 = vpop.f32.mrf.mxu0
      %v1304 = vadd.f32 %v1239, %v1303
      %v1305 = vpop.f32.mrf.mxu0
      %v1306 = vadd.f32 %v1239, %v1305
      %1307 = vmatmul.bf16.gmra.mxu0 %v1215
      %v1308 = vpop.f32.mrf.mxu0
      %v1309 = vadd.f32 %v1239, %v1308
      %v1310 = vpop.f32.mrf.mxu0
      %v1311 = vadd.f32 %v1239, %v1310
      %1312 = vmatmul.bf16.gmra.mxu0 %v1216
      %v1313 = vpop.f32.mrf.mxu0
      %v1314 = vadd.f32 %v1239, %v1313
      %v1315 = vpop.f32.mrf.mxu0
      %v1316 = vadd.f32 %v1239, %v1315
      %1317 = vmatmul.bf16.gmra.mxu0 %v1217
      %v1318 = vpop.f32.mrf.mxu0
      %v1319 = vadd.f32 %v1239, %v1318
      %v1320 = vpop.f32.mrf.mxu0
      %v1321 = vadd.f32 %v1239, %v1320
      %1322 = vmatmul.bf16.gmra.mxu0 %v1218
      %v1323 = vpop.f32.mrf.mxu0
      %v1324 = vadd.f32 %v1239, %v1323
      %v1325 = vpop.f32.mrf.mxu0
      %v1326 = vadd.f32 %v1239, %v1325
      %1327 = vmatmul.bf16.gmra.mxu0 %v1219
      %v1328 = vpop.f32.mrf.mxu0
      %v1329 = vadd.f32 %v1239, %v1328
      %v1330 = vpop.f32.mrf.mxu0
      %v1331 = vadd.f32 %v1239, %v1330
      %1332 = vmatmul.bf16.gmra.mxu0 %v1220
      %v1333 = vpop.f32.mrf.mxu0
      %v1334 = vadd.f32 %v1239, %v1333
      %v1335 = vpop.f32.mrf.mxu0
      %v1336 = vadd.f32 %v1239, %v1335
      %1337 = vdwg.mxu0
      %v1338 = vmax.f32 %v1299, 0.0
      %v1339 = vmax.f32 %v1301, 0.0
      %v1340 = vmax.f32 %v1304, 0.0
      %v1341 = vmax.f32 %v1306, 0.0
      %v1342 = vmax.f32 %v1309, 0.0
      %v1343 = vmax.f32 %v1311, 0.0
      %v1344 = vmax.f32 %v1314, 0.0
      %v1345 = vmax.f32 %v1316, 0.0
      %v1346 = vmax.f32 %v1319, 0.0
      %v1347 = vmax.f32 %v1321, 0.0
      %v1348 = vmax.f32 %v1324, 0.0
      %v1349 = vmax.f32 %v1326, 0.0
      %v1350 = vmax.f32 %v1329, 0.0
      %v1351 = vmax.f32 %v1331, 0.0
      %v1352 = vmax.f32 %v1334, 0.0
      %v1353 = vmax.f32 %v1336, 0.0
      %v1354 = vpack.c.bf16 %v1339, %v1338
      %v1355 = vpack.c.bf16 %v1341, %v1340
      %v1356 = vpack.c.bf16 %v1343, %v1342
      %v1357 = vpack.c.bf16 %v1345, %v1344
      %v1358 = vpack.c.bf16 %v1347, %v1346
      %v1359 = vpack.c.bf16 %v1349, %v1348
      %v1360 = vpack.c.bf16 %v1351, %v1350
      %v1361 = vpack.c.bf16 %v1353, %v1352
      %v1362 = vld [vmem:[%s10] sm:$0xf]
      %v1363 = vld [vmem:[%s10 + $0x4] sm:$0xf]
      %v1364 = vld [vmem:[%s10 + $0x8] sm:$0xf]
      %v1365 = vld [vmem:[%s10 + $0xc] sm:$0xf]
      %v1366 = vld [vmem:[%s10 + $0x10] sm:$0xf]
      %v1367 = vld [vmem:[%s10 + $0x14] sm:$0xf]
      %v1368 = vld [vmem:[%s10 + $0x18] sm:$0xf]
      %v1369 = vld [vmem:[%s10 + $0x1c] sm:$0xf]
      %v1370 = vld [vmem:[%s10 + $0x20] sm:$0xf]
      %v1371 = vld [vmem:[%s10 + $0x24] sm:$0xf]
      %v1372 = vld [vmem:[%s10 + $0x28] sm:$0xf]
      %v1373 = vld [vmem:[%s10 + $0x2c] sm:$0xf]
      %v1374 = vld [vmem:[%s10 + $0x30] sm:$0xf]
      %v1375 = vld [vmem:[%s10 + $0x34] sm:$0xf]
      %v1376 = vld [vmem:[%s10 + $0x38] sm:$0xf]
      %v1377 = vld [vmem:[%s10 + $0x3c] sm:$0xf]
      %v1378 = vld [vmem:[%s11] sm:$0x1]
      %v1380 = vperm.slane %v1378, 0
      %v1398 = vunpack.c.l.b16 %v1362
      %v1399 = vunpack.c.l.b16 %v1363
      %v1400 = vunpack.c.l.b16 %v1364
      %v1401 = vunpack.c.l.b16 %v1365
      %v1402 = vunpack.c.l.b16 %v1366
      %v1403 = vunpack.c.l.b16 %v1367
      %v1404 = vunpack.c.l.b16 %v1368
      %v1405 = vunpack.c.l.b16 %v1369
      %v1406 = vunpack.c.l.b16 %v1370
      %v1407 = vunpack.c.l.b16 %v1371
      %v1408 = vunpack.c.l.b16 %v1372
      %v1409 = vunpack.c.l.b16 %v1373
      %v1410 = vunpack.c.l.b16 %v1374
      %v1411 = vunpack.c.l.b16 %v1375
      %v1412 = vunpack.c.l.b16 %v1376
      %v1413 = vunpack.c.l.b16 %v1377
      %v1414 = vpack.c.b16 %v1399, %v1398
      %v1415 = vpack.c.b16 %v1401, %v1400
      %v1416 = vpack.c.b16 %v1403, %v1402
      %v1417 = vpack.c.b16 %v1405, %v1404
      %v1418 = vpack.c.b16 %v1407, %v1406
      %v1419 = vpack.c.b16 %v1409, %v1408
      %v1420 = vpack.c.b16 %v1411, %v1410
      %v1421 = vpack.c.b16 %v1413, %v1412
      %1430 = vmatpush.bf16.msra.mxu0 %v1421
      %1431 = vmatpush.bf16.msra.mxu0 %v1420
      %1432 = vmatpush.bf16.msra.mxu0 %v1419
      %1433 = vmatpush.bf16.msra.mxu0 %v1418
      %1434 = vmatpush.bf16.msra.mxu0 %v1417
      %1435 = vmatpush.bf16.msra.mxu0 %v1416
      %1436 = vmatpush.bf16.msra.mxu0 %v1415
      %1437 = vmatpush.bf16.msra.mxu0 %v1414
      %1438 = vmatmul.bf16.gmra.mxu0 %v1354
      %v1439 = vpop.f32.mrf.mxu0
      %v1440 = vadd.f32 %v1380, %v1439
      %v1441 = vpop.f32.mrf.mxu0
      %v1442 = vadd.f32 %v1380, %v1441
      %1443 = vmatmul.bf16.gmra.mxu0 %v1355
      %v1444 = vpop.f32.mrf.mxu0
      %v1445 = vadd.f32 %v1380, %v1444
      %v1446 = vpop.f32.mrf.mxu0
      %v1447 = vadd.f32 %v1380, %v1446
      %1448 = vmatmul.bf16.gmra.mxu0 %v1356
      %v1449 = vpop.f32.mrf.mxu0
      %v1450 = vadd.f32 %v1380, %v1449
      %v1451 = vpop.f32.mrf.mxu0
      %v1452 = vadd.f32 %v1380, %v1451
      %1453 = vmatmul.bf16.gmra.mxu0 %v1357
      %v1454 = vpop.f32.mrf.mxu0
      %v1455 = vadd.f32 %v1380, %v1454
      %v1456 = vpop.f32.mrf.mxu0
      %v1457 = vadd.f32 %v1380, %v1456
      %1458 = vmatmul.bf16.gmra.mxu0 %v1358
      %v1459 = vpop.f32.mrf.mxu0
      %v1460 = vadd.f32 %v1380, %v1459
      %v1461 = vpop.f32.mrf.mxu0
      %v1462 = vadd.f32 %v1380, %v1461
      %1463 = vmatmul.bf16.gmra.mxu0 %v1359
      %v1464 = vpop.f32.mrf.mxu0
      %v1465 = vadd.f32 %v1380, %v1464
      %v1466 = vpop.f32.mrf.mxu0
      %v1467 = vadd.f32 %v1380, %v1466
      %1468 = vmatmul.bf16.gmra.mxu0 %v1360
      %v1469 = vpop.f32.mrf.mxu0
      %v1470 = vadd.f32 %v1380, %v1469
      %v1471 = vpop.f32.mrf.mxu0
      %v1472 = vadd.f32 %v1380, %v1471
      %1473 = vmatmul.bf16.gmra.mxu0 %v1361
      %v1474 = vpop.f32.mrf.mxu0
      %v1475 = vadd.f32 %v1380, %v1474
      %v1476 = vpop.f32.mrf.mxu0
      %v1477 = vadd.f32 %v1380, %v1476
      %1478 = vdwg.mxu0
      %1479 = vst [vmem:[%s451] sm:$0xff] %v1440
      %1480 = vst [vmem:[%s451 + $0x8] sm:$0xff] %v1442
      %1481 = vst [vmem:[%s451 + $0x10] sm:$0xff] %v1445
      %1482 = vst [vmem:[%s451 + $0x18] sm:$0xff] %v1447
      %1483 = vst [vmem:[%s451 + $0x20] sm:$0xff] %v1450
      %1484 = vst [vmem:[%s451 + $0x28] sm:$0xff] %v1452
      %1485 = vst [vmem:[%s451 + $0x30] sm:$0xff] %v1455
      %1486 = vst [vmem:[%s451 + $0x38] sm:$0xff] %v1457
      %1487 = vst [vmem:[%s451 + $0x40] sm:$0xff] %v1460
      %1488 = vst [vmem:[%s451 + $0x48] sm:$0xff] %v1462
      %1489 = vst [vmem:[%s451 + $0x50] sm:$0xff] %v1465
      %1490 = vst [vmem:[%s451 + $0x58] sm:$0xff] %v1467
      %1491 = vst [vmem:[%s451 + $0x60] sm:$0xff] %v1470
      %1492 = vst [vmem:[%s451 + $0x68] sm:$0xff] %v1472
      %1493 = vst [vmem:[%s451 + $0x70] sm:$0xff] %v1475
      %1494 = vst [vmem:[%s451 + $0x78] sm:$0xff] %v1477
      %s1495 = smul.u32 16, %s25
      %p1496 = scmp.lt.s32.totalorder %s1495, 31
      %s1497 = scalar_select %p1496, %s1495, 31
      %s1498 = smul.addr %s1497, 8
      %s1499 = scalar_lea.vmem %s12, %s1498
      %s1500 = smul.u32 16, %s25
      %p1501 = scmp.lt.s32.totalorder %s1500, 31
      %s1502 = scalar_select %p1501, %s1500, 31
      %s1503 = smul.addr %s1502, 2
      %s1504 = smul.addr %s1503, 8
      %s1505 = scalar_lea.vmem %s13, %s1504
      // Predicated region
      $region69: #{sae_network_forward.1} parent=67 // pred_check
        %p1506 = pneg %p300
      $region70: #{sae_network_forward.1} parent=67 // pred_check_branch
        %1508 = sbr.rel (%p1506) target = $region72
      $region71: #{sae_network_forward.1} parent=67 // pred_region
        %s1509 = smul.u32 16, %s25
      $region72: #{sae_network_forward.1} parent=67 // pred_fallthru
        _
      // Predicated region
      $region73: #{sae_network_forward.1} parent=67 // pred_check
        %p1510 = pneg %p326
      $region74: #{sae_network_forward.1} parent=67 // pred_check_branch
        %1512 = sbr.rel (%p1510) target = $region76
      $region75: #{sae_network_forward.1} parent=67 // pred_region
        %s1513 = smul.u32 16, %s25
      $region76: #{sae_network_forward.1} parent=67 // pred_fallthru
        _
    $region68: #{sae_network_forward.1} parent=5 // pred_fallthru
      _
    %p1514 = scmp.le.s32.totalorder 2, %s20
    // Predicated region
    $region77: #{sae_network_forward.1} parent=5 // pred_check
      %p1515 = pneg %p1514
    $region78: #{sae_network_forward.1} parent=5 // pred_check_branch
      %1517 = sbr.rel (%p1515) target = $region80
    $region79: #{sae_network_forward.1} parent=5 // pred_region
      %s1518 = ssub.s32 %s20, 2
      // Predicated region
      $region81: #{sae_network_forward.1} parent=79 // pred_check
        %p1519 = pneg %p306
      $region82: #{sae_network_forward.1} parent=79 // pred_check_branch
        %1521 = sbr.rel (%p1519) target = $region84
      $region83: #{sae_network_forward.1} parent=79 // pred_region
        %s1522 = smul.u32 16, %s26
        %p1523 = scmp.lt.s32.totalorder %s1522, 31
        %s1524 = scalar_select %p1523, %s1522, 31
        %s1525 = smul.addr %s1524, 8
        %s1526 = scalar_lea.vmem %s12, %s1525
      $region84: #{sae_network_forward.1} parent=79 // pred_fallthru
        _
      // Predicated region
      $region85: #{sae_network_forward.1} parent=79 // pred_check
        %p1527 = pneg %p332
      $region86: #{sae_network_forward.1} parent=79 // pred_check_branch
        %1529 = sbr.rel (%p1527) target = $region88
      $region87: #{sae_network_forward.1} parent=79 // pred_region
        %s1530 = smul.u32 16, %s26
        %p1531 = scmp.lt.s32.totalorder %s1530, 31
        %s1532 = scalar_select %p1531, %s1530, 31
        %s1533 = smul.addr %s1532, 2
        %s1534 = smul.addr %s1533, 8
        %s1535 = scalar_lea.vmem %s13, %s1534
      $region88: #{sae_network_forward.1} parent=79 // pred_fallthru
        _
    $region80: #{sae_network_forward.1} parent=5 // pred_fallthru
      _
  $region6: #{sae_network_forward.1} parent=0 // loop_footer
    %s24 = sadd.s32 1, %s20
  $region7: #{sae_network_forward.1} parent=0 // loop_footer_branch
    %19 = sbr.rel target = $region3
  $region8: #{sae_network_forward.1} parent=0 // loop_exit
    _

</llo_original>
